<compile_context>
chip_gen: v7x
topology: tpu7x:2x2x1
jax: 0.10.0
libtpu: 0.0.40
codegen_flags: <defaults>
</compile_context>

<pallas_src>
import functools

import jax
import jax.numpy as jnp
from jax.experimental import pallas as pl
from jax.experimental.pallas import tpu as pltpu

NEG_SLOPE = 0.01  # torch.nn.LeakyReLU default


def _leaky_relu(v):
    return jnp.where(v >= 0, v, NEG_SLOPE * v)


def _knn_idx(pos, batch, k):
    """Per-graph knn (no self loops). Returns (N, k) neighbour indices."""
    sq = jnp.sum(pos * pos, axis=-1)
    d2 = sq[:, None] + sq[None, :] - 2.0 * (pos @ pos.T)
    valid = (batch[:, None] == batch[None, :]) & ~jnp.eye(pos.shape[0], dtype=bool)
    d2 = jnp.where(valid, d2, jnp.inf)
    _, idx = jax.lax.top_k(-d2, k)
    return idx


def _edgeconv_kernel(xiT_ref, xjT_ref, w1at_ref, w1bt_ref, b1_ref, w2t_ref, b2_ref,
                     out_ref, *, k, l3, chunk):
    """Feature-major shared-MLP EdgeConv + max/mean/add for one tile of nodes.

    xiT_ref:  (F, tm)      destination-node features, nodes on the lane axis
    xjT_ref:  (k, F, tm)   slot-major neighbour features
    w1at_ref: (l2, F)      (W1a - W1b)^T   (x_i folded into the weights)
    w1bt_ref: (l2, F)      W1b^T
    w2t_ref:  (l3, l2)     W2^T
    b1_ref:   (l2, 1), b2_ref: (l3, 1)
    out_ref:  (3*l3, tm)   [max ; mean ; add] stacked on sublanes, lane-dense
    """
    xiT = xiT_ref[...]
    w1at = w1at_ref[...]
    w1bt = w1bt_ref[...]
    b1 = b1_ref[...]
    w2t = w2t_ref[...]
    b2 = b2_ref[...]
    tm = xiT.shape[1]

    # Slot-invariant half of Linear1 (x_i folded into W1a' = W1a - W1b).
    base = jnp.dot(w1at, xiT, preferred_element_type=jnp.float32) + b1      # (l2, tm)

    # Hoisted broadcasts / tiles (JAX does not CSE broadcast_in_dim in loops).
    if chunk > 1:
        base_c = jnp.concatenate([base] * chunk, axis=-1)                   # (l2, chunk*tm)
    else:
        base_c = base
    b2_c = jnp.broadcast_to(b2, (l3, chunk * tm))

    acc_max = None
    acc_sum = None
    for c in range(k // chunk):
        # Batch `chunk` neighbour slots along the lane axis -> one long MXU
        # stream per weight instead of k tiny matmuls.
        if chunk > 1:
            xj_c = jnp.concatenate(
                [xjT_ref[c * chunk + s] for s in range(chunk)], axis=-1)     # (F, chunk*tm)
        else:
            xj_c = xjT_ref[c]
        z1 = _leaky_relu(
            jnp.dot(w1bt, xj_c, preferred_element_type=jnp.float32) + base_c)
        e = _leaky_relu(
            jnp.dot(w2t, z1, preferred_element_type=jnp.float32) + b2_c)     # (l3, chunk*tm)
        for s in range(chunk):
            es = e[:, s * tm:(s + 1) * tm]        # vreg-aligned lane slice (tm % 128 == 0)
            if acc_max is None:
                acc_max = es
                acc_sum = es
            else:
                acc_max = jnp.maximum(acc_max, es)  # pure VPU on lane-full tiles
                acc_sum = acc_sum + es

    acc_mean = acc_sum * (1.0 / k)
    # Sublane-sliced, lane-dense stores (no concat, no padding lanes, no vst.msk).
    out_ref[0:l3, :] = _leaky_relu(acc_max).astype(out_ref.dtype)
    out_ref[l3:2 * l3, :] = _leaky_relu(acc_mean).astype(out_ref.dtype)
    out_ref[2 * l3:3 * l3, :] = _leaky_relu(acc_sum).astype(out_ref.dtype)


def oblock_forward(x, edge_index_unused, batch, params, *, k, tm=512):
    """Pallas implementation of ØBlock.forward. Returns (x_out, edge_index)."""
    del edge_index_unused  # the PyTorch forward recomputes edge_index via knn
    N, F = x.shape
    w1, b1, w2, b2 = params
    l2 = w1.shape[1]
    l3 = w2.shape[1]

    tm = min(tm, N)
    assert N % tm == 0 and tm % 128 == 0, (
        "tm must divide N and be a multiple of 128 (nodes sit on the lane axis)")
    assert l3 % 8 == 0, "l3 must be a multiple of 8 for sublane-sliced stores"

    # Largest slot-chunk (divisor of k) whose batched lane width stays <= 512,
    # so the (l2, chunk*tm) intermediates do not blow past the vreg file.
    chunk = 1
    for c in range(k, 0, -1):
        if k % c == 0 and c * tm <= 512:
            chunk = c
            break

    # ---- knn_graph on pos (glue, plain JAX) -------------------------------
    pos = x[:, 0:3]
    idx = _knn_idx(pos, batch, k)                         # (N, k) neighbours j of node i

    # source_to_target edge_index: row = source j, col = target i
    edge_index = jnp.stack(
        [idx.reshape(-1), jnp.repeat(jnp.arange(N, dtype=idx.dtype), k)], axis=0)

    # ---- neighbour gather directly in the feature-major layout ------------
    xT = x.T                                              # (F, N): nodes on lanes
    xj_slots = jnp.swapaxes(xT[:, idx.T], 0, 1)           # (F, k, N) -> (k, F, N)

    # ---- fold x_i into the weights; transpose everything feature-major ----
    w1at = (w1[:F, :] - w1[F:, :]).T                      # (l2, F): coefficient of x_i
    w1bt = w1[F:, :].T                                    # (l2, F): coefficient of x_j
    w2t = w2.T                                            # (l3, l2)
    b1t = b1.reshape(l2, 1)
    b2t = b2.reshape(l3, 1)

    # ---- Pallas kernel: shared-MLP EdgeConv + max/mean/add + LeakyReLU ----
    # Per-step double-buffered VMEM footprint is tiny in this layout
    # (~(k+2)*8*tm*4 B for inputs + 3*l3*tm*4 B out), so tm can be raised a lot
    # before vmem_limit_bytes needs touching, even on v7x (64 MiB VMEM).
    kernel = functools.partial(_edgeconv_kernel, k=k, l3=l3, chunk=chunk)
    outT = pl.pallas_call(
        kernel,
        out_shape=jax.ShapeDtypeStruct((3 * l3, N), jnp.float32),
        grid_spec=pltpu.PrefetchScalarGridSpec(
            num_scalar_prefetch=0,
            grid=(N // tm,),
            in_specs=[
                pl.BlockSpec((F, tm), lambda i: (0, i)),        # x_i^T tile
                pl.BlockSpec((k, F, tm), lambda i: (0, 0, i)),  # x_j slots (feature-major)
                pl.BlockSpec((l2, F), lambda i: (0, 0)),        # (W1a-W1b)^T (resident)
                pl.BlockSpec((l2, F), lambda i: (0, 0)),        # W1b^T       (resident)
                pl.BlockSpec((l2, 1), lambda i: (0, 0)),        # b1
                pl.BlockSpec((l3, l2), lambda i: (0, 0)),       # W2^T        (resident)
                pl.BlockSpec((l3, 1), lambda i: (0, 0)),        # b2
            ],
            out_specs=pl.BlockSpec((3 * l3, tm), lambda i: (0, i)),
        ),
        compiler_params=pltpu.CompilerParams(dimension_semantics=("parallel",)),
    )(xT, xj_slots, w1at, w1bt, b1t, w2t, b2t)

    # One wrapper-side transpose back to the module's (N, 3*l3) layout.
    return outT.T, edge_index


def _reference_forward(x, batch, params, *, k):
    """Pure-JAX reference for correctness checking."""
    w1, b1, w2, b2 = params
    N, F = x.shape
    idx = _knn_idx(x[:, 0:3], batch, k)
    xi = jnp.broadcast_to(x[:, None, :], (N, k, F))
    xj = x[idx]
    h = jnp.concatenate([xi, xj - xi], axis=-1)                # (N, k, 2F)
    z1 = _leaky_relu(h @ w1 + b1[0])
    e = _leaky_relu(z1 @ w2 + b2[0])                           # (N, k, l3)
    x_max = jnp.max(e, axis=1)
    x_add = jnp.sum(e, axis=1)
    x_mean = x_add / k
    return _leaky_relu(jnp.concatenate([x_max, x_mean, x_add], axis=-1))


if __name__ == "__main__":
    # Small shapes consistent with the module: l1 node features (first 3 = pos).
    l1, l2, l3, k = 6, 32, 32, 8
    N = 256                                  # 2 graphs x 128 nodes
    tm = 128                                 # grid of 2 steps (v7x: both TCs busy)

    key = jax.random.PRNGKey(0)
    kx, kw1, kb1, kw2, kb2 = jax.random.split(key, 5)

    x = jax.random.normal(kx, (N, l1), jnp.float32)
    batch = jnp.concatenate(
        [jnp.zeros(N // 2, jnp.int32), jnp.ones(N // 2, jnp.int32)])
    dummy_edge_index = jnp.zeros((2, 1), jnp.int32)   # ignored (recomputed by forward)

    # Deterministic synthetic MLP parameters (Linear stored transposed: x @ W + b).
    w1 = 0.2 * jax.random.normal(kw1, (2 * l1, l2), jnp.float32)
    b1 = 0.1 * jax.random.normal(kb1, (1, l2), jnp.float32)
    w2 = 0.2 * jax.random.normal(kw2, (l2, l3), jnp.float32)
    b2 = 0.1 * jax.random.normal(kb2, (1, l3), jnp.float32)
    params = (w1, b1, w2, b2)

    out, edge_index = oblock_forward(x, dummy_edge_index, batch, params, k=k, tm=tm)
    out = jax.block_until_ready(out)
    edge_index = jax.block_until_ready(edge_index)

    ref = _reference_forward(x, batch, params, k=k)
    assert out.shape == (N, 3 * l3)
    assert edge_index.shape == (2, N * k)
    assert jnp.allclose(out, ref, atol=1e-4, rtol=1e-4), (
        float(jnp.max(jnp.abs(out - ref))))

    print("KERNEL_OK")
</pallas_src>

<mosaic_0001>
module attributes {stable_mosaic.version = 11 : i64} {
  func.func @_edgeconv_kernel(%arg0: i32, %arg1: memref<6x128xf32, #tpu.memory_space<vmem>>, %arg2: memref<8x6x128xf32, #tpu.memory_space<vmem>>, %arg3: memref<32x6xf32, #tpu.memory_space<vmem>>, %arg4: memref<32x6xf32, #tpu.memory_space<vmem>>, %arg5: memref<32x1xf32, #tpu.memory_space<vmem>>, %arg6: memref<32x32xf32, #tpu.memory_space<vmem>>, %arg7: memref<32x1xf32, #tpu.memory_space<vmem>>, %arg8: memref<96x128xf32, #tpu.memory_space<vmem>>) attributes {dimension_semantics = [#tpu.dimension_semantics<parallel>], iteration_bounds = array<i64: 2>, scalar_prefetch = 0 : i64, scratch_operands = 0 : i64, tpu.core_type = #tpu.core_type<tc>, window_params = [{transform_indices = @transform_0, window_bounds = array<i64: 6, 128>}, {transform_indices = @transform_1, window_bounds = array<i64: 8, 6, 128>}, {pipeline_mode = #tpu.pipeline_mode<synchronous>, transform_indices = @transform_2, window_bounds = array<i64: 32, 6>}, {pipeline_mode = #tpu.pipeline_mode<synchronous>, transform_indices = @transform_3, window_bounds = array<i64: 32, 6>}, {pipeline_mode = #tpu.pipeline_mode<synchronous>, transform_indices = @transform_4, window_bounds = array<i64: 32, 1>}, {pipeline_mode = #tpu.pipeline_mode<synchronous>, transform_indices = @transform_5, window_bounds = array<i64: 32, 32>}, {pipeline_mode = #tpu.pipeline_mode<synchronous>, transform_indices = @transform_6, window_bounds = array<i64: 32, 1>}, {transform_indices = @transform_7, window_bounds = array<i64: 96, 128>}]} {
    %c0 = arith.constant 0 : index
    %c0_0 = arith.constant 0 : index
    %0 = vector.load %arg1[%c0, %c0_0] : memref<6x128xf32, #tpu.memory_space<vmem>>, vector<6x128xf32>
    %c0_1 = arith.constant 0 : index
    %c0_2 = arith.constant 0 : index
    %1 = vector.load %arg3[%c0_1, %c0_2] : memref<32x6xf32, #tpu.memory_space<vmem>>, vector<32x6xf32>
    %c0_3 = arith.constant 0 : index
    %c0_4 = arith.constant 0 : index
    %2 = vector.load %arg4[%c0_3, %c0_4] : memref<32x6xf32, #tpu.memory_space<vmem>>, vector<32x6xf32>
    %c0_5 = arith.constant 0 : index
    %c0_6 = arith.constant 0 : index
    %3 = vector.load %arg5[%c0_5, %c0_6] : memref<32x1xf32, #tpu.memory_space<vmem>>, vector<32x1xf32>
    %c0_7 = arith.constant 0 : index
    %c0_8 = arith.constant 0 : index
    %4 = vector.load %arg6[%c0_7, %c0_8] : memref<32x32xf32, #tpu.memory_space<vmem>>, vector<32x32xf32>
    %c0_9 = arith.constant 0 : index
    %c0_10 = arith.constant 0 : index
    %5 = vector.load %arg7[%c0_9, %c0_10] : memref<32x1xf32, #tpu.memory_space<vmem>>, vector<32x1xf32>
    %cst = arith.constant dense<0.000000e+00> : vector<32x128xf32>
    %6 = tpu.matmul %1, %0, %cst {dimension_numbers = #tpu.dot_dimension_numbers<[1], [0], [0], [1], [0, 0, 1, 1], [], []>} : vector<32x6xf32>, vector<6x128xf32>, vector<32x128xf32> -> vector<32x128xf32>
    %7 = vector.broadcast %3 : vector<32x1xf32> to vector<32x128xf32>
    %8 = arith.addf %6, %7 : vector<32x128xf32>
    %9 = tpu.concatenate %8, %8, %8, %8 in 1 : vector<32x128xf32>, vector<32x128xf32>, vector<32x128xf32>, vector<32x128xf32> -> vector<32x512xf32>
    %10 = vector.shape_cast %5 : vector<32x1xf32> to vector<32x1xf32>
    %11 = vector.broadcast %10 : vector<32x1xf32> to vector<32x512xf32>
    %c0_11 = arith.constant 0 : index
    %c0_12 = arith.constant 0 : index
    %c0_13 = arith.constant 0 : index
    %12 = vector.load %arg2[%c0_11, %c0_12, %c0_13] : memref<8x6x128xf32, #tpu.memory_space<vmem>>, vector<1x6x128xf32>
    %13 = vector.shape_cast %12 : vector<1x6x128xf32> to vector<6x128xf32>
    %c1 = arith.constant 1 : index
    %c0_14 = arith.constant 0 : index
    %c0_15 = arith.constant 0 : index
    %14 = vector.load %arg2[%c1, %c0_14, %c0_15] : memref<8x6x128xf32, #tpu.memory_space<vmem>>, vector<1x6x128xf32>
    %15 = vector.shape_cast %14 : vector<1x6x128xf32> to vector<6x128xf32>
    %c2 = arith.constant 2 : index
    %c0_16 = arith.constant 0 : index
    %c0_17 = arith.constant 0 : index
    %16 = vector.load %arg2[%c2, %c0_16, %c0_17] : memref<8x6x128xf32, #tpu.memory_space<vmem>>, vector<1x6x128xf32>
    %17 = vector.shape_cast %16 : vector<1x6x128xf32> to vector<6x128xf32>
    %c3 = arith.constant 3 : index
    %c0_18 = arith.constant 0 : index
    %c0_19 = arith.constant 0 : index
    %18 = vector.load %arg2[%c3, %c0_18, %c0_19] : memref<8x6x128xf32, #tpu.memory_space<vmem>>, vector<1x6x128xf32>
    %19 = vector.shape_cast %18 : vector<1x6x128xf32> to vector<6x128xf32>
    %20 = tpu.concatenate %13, %15, %17, %19 in 1 : vector<6x128xf32>, vector<6x128xf32>, vector<6x128xf32>, vector<6x128xf32> -> vector<6x512xf32>
    %cst_20 = arith.constant dense<0.000000e+00> : vector<32x512xf32>
    %21 = tpu.matmul %2, %20, %cst_20 {dimension_numbers = #tpu.dot_dimension_numbers<[1], [0], [0], [1], [0, 0, 1, 1], [], []>} : vector<32x6xf32>, vector<6x512xf32>, vector<32x512xf32> -> vector<32x512xf32>
    %22 = arith.addf %21, %9 : vector<32x512xf32>
    %cst_21 = arith.constant 0.000000e+00 : f32
    %23 = vector.broadcast %cst_21 : f32 to vector<32x512xf32>
    %24 = arith.cmpf oge, %22, %23 : vector<32x512xf32>
    %cst_22 = arith.constant 0.00999999977 : f32
    %25 = vector.broadcast %cst_22 : f32 to vector<32x512xf32>
    %26 = arith.mulf %25, %22 : vector<32x512xf32>
    %27 = arith.select %24, %22, %26 : vector<32x512xi1>, vector<32x512xf32>
    %cst_23 = arith.constant dense<0.000000e+00> : vector<32x512xf32>
    %28 = tpu.matmul %4, %27, %cst_23 {dimension_numbers = #tpu.dot_dimension_numbers<[1], [0], [0], [1], [0, 0, 1, 1], [], []>} : vector<32x32xf32>, vector<32x512xf32>, vector<32x512xf32> -> vector<32x512xf32>
    %29 = arith.addf %28, %11 : vector<32x512xf32>
    %cst_24 = arith.constant 0.000000e+00 : f32
    %30 = vector.broadcast %cst_24 : f32 to vector<32x512xf32>
    %31 = arith.cmpf oge, %29, %30 : vector<32x512xf32>
    %cst_25 = arith.constant 0.00999999977 : f32
    %32 = vector.broadcast %cst_25 : f32 to vector<32x512xf32>
    %33 = arith.mulf %32, %29 : vector<32x512xf32>
    %34 = arith.select %31, %29, %33 : vector<32x512xi1>, vector<32x512xf32>
    %35 = vector.extract_strided_slice %34 {offsets = [0, 0], sizes = [32, 128], strides = [1, 1]} : vector<32x512xf32> to vector<32x128xf32>
    %36 = vector.extract_strided_slice %34 {offsets = [0, 128], sizes = [32, 128], strides = [1, 1]} : vector<32x512xf32> to vector<32x128xf32>
    %37 = arith.maximumf %35, %36 : vector<32x128xf32>
    %38 = arith.addf %35, %36 : vector<32x128xf32>
    %39 = vector.extract_strided_slice %34 {offsets = [0, 256], sizes = [32, 128], strides = [1, 1]} : vector<32x512xf32> to vector<32x128xf32>
    %40 = arith.maximumf %37, %39 : vector<32x128xf32>
    %41 = arith.addf %38, %39 : vector<32x128xf32>
    %42 = vector.extract_strided_slice %34 {offsets = [0, 384], sizes = [32, 128], strides = [1, 1]} : vector<32x512xf32> to vector<32x128xf32>
    %43 = arith.maximumf %40, %42 : vector<32x128xf32>
    %44 = arith.addf %41, %42 : vector<32x128xf32>
    %c4 = arith.constant 4 : index
    %c0_26 = arith.constant 0 : index
    %c0_27 = arith.constant 0 : index
    %45 = vector.load %arg2[%c4, %c0_26, %c0_27] : memref<8x6x128xf32, #tpu.memory_space<vmem>>, vector<1x6x128xf32>
    %46 = vector.shape_cast %45 : vector<1x6x128xf32> to vector<6x128xf32>
    %c5 = arith.constant 5 : index
    %c0_28 = arith.constant 0 : index
    %c0_29 = arith.constant 0 : index
    %47 = vector.load %arg2[%c5, %c0_28, %c0_29] : memref<8x6x128xf32, #tpu.memory_space<vmem>>, vector<1x6x128xf32>
    %48 = vector.shape_cast %47 : vector<1x6x128xf32> to vector<6x128xf32>
    %c6 = arith.constant 6 : index
    %c0_30 = arith.constant 0 : index
    %c0_31 = arith.constant 0 : index
    %49 = vector.load %arg2[%c6, %c0_30, %c0_31] : memref<8x6x128xf32, #tpu.memory_space<vmem>>, vector<1x6x128xf32>
    %50 = vector.shape_cast %49 : vector<1x6x128xf32> to vector<6x128xf32>
    %c7 = arith.constant 7 : index
    %c0_32 = arith.constant 0 : index
    %c0_33 = arith.constant 0 : index
    %51 = vector.load %arg2[%c7, %c0_32, %c0_33] : memref<8x6x128xf32, #tpu.memory_space<vmem>>, vector<1x6x128xf32>
    %52 = vector.shape_cast %51 : vector<1x6x128xf32> to vector<6x128xf32>
    %53 = tpu.concatenate %46, %48, %50, %52 in 1 : vector<6x128xf32>, vector<6x128xf32>, vector<6x128xf32>, vector<6x128xf32> -> vector<6x512xf32>
    %cst_34 = arith.constant dense<0.000000e+00> : vector<32x512xf32>
    %54 = tpu.matmul %2, %53, %cst_34 {dimension_numbers = #tpu.dot_dimension_numbers<[1], [0], [0], [1], [0, 0, 1, 1], [], []>} : vector<32x6xf32>, vector<6x512xf32>, vector<32x512xf32> -> vector<32x512xf32>
    %55 = arith.addf %54, %9 : vector<32x512xf32>
    %cst_35 = arith.constant 0.000000e+00 : f32
    %56 = vector.broadcast %cst_35 : f32 to vector<32x512xf32>
    %57 = arith.cmpf oge, %55, %56 : vector<32x512xf32>
    %cst_36 = arith.constant 0.00999999977 : f32
    %58 = vector.broadcast %cst_36 : f32 to vector<32x512xf32>
    %59 = arith.mulf %58, %55 : vector<32x512xf32>
    %60 = arith.select %57, %55, %59 : vector<32x512xi1>, vector<32x512xf32>
    %cst_37 = arith.constant dense<0.000000e+00> : vector<32x512xf32>
    %61 = tpu.matmul %4, %60, %cst_37 {dimension_numbers = #tpu.dot_dimension_numbers<[1], [0], [0], [1], [0, 0, 1, 1], [], []>} : vector<32x32xf32>, vector<32x512xf32>, vector<32x512xf32> -> vector<32x512xf32>
    %62 = arith.addf %61, %11 : vector<32x512xf32>
    %cst_38 = arith.constant 0.000000e+00 : f32
    %63 = vector.broadcast %cst_38 : f32 to vector<32x512xf32>
    %64 = arith.cmpf oge, %62, %63 : vector<32x512xf32>
    %cst_39 = arith.constant 0.00999999977 : f32
    %65 = vector.broadcast %cst_39 : f32 to vector<32x512xf32>
    %66 = arith.mulf %65, %62 : vector<32x512xf32>
    %67 = arith.select %64, %62, %66 : vector<32x512xi1>, vector<32x512xf32>
    %68 = vector.extract_strided_slice %67 {offsets = [0, 0], sizes = [32, 128], strides = [1, 1]} : vector<32x512xf32> to vector<32x128xf32>
    %69 = arith.maximumf %43, %68 : vector<32x128xf32>
    %70 = arith.addf %44, %68 : vector<32x128xf32>
    %71 = vector.extract_strided_slice %67 {offsets = [0, 128], sizes = [32, 128], strides = [1, 1]} : vector<32x512xf32> to vector<32x128xf32>
    %72 = arith.maximumf %69, %71 : vector<32x128xf32>
    %73 = arith.addf %70, %71 : vector<32x128xf32>
    %74 = vector.extract_strided_slice %67 {offsets = [0, 256], sizes = [32, 128], strides = [1, 1]} : vector<32x512xf32> to vector<32x128xf32>
    %75 = arith.maximumf %72, %74 : vector<32x128xf32>
    %76 = arith.addf %73, %74 : vector<32x128xf32>
    %77 = vector.extract_strided_slice %67 {offsets = [0, 384], sizes = [32, 128], strides = [1, 1]} : vector<32x512xf32> to vector<32x128xf32>
    %78 = arith.maximumf %75, %77 : vector<32x128xf32>
    %79 = arith.addf %76, %77 : vector<32x128xf32>
    %cst_40 = arith.constant 1.250000e-01 : f32
    %80 = vector.broadcast %cst_40 : f32 to vector<32x128xf32>
    %81 = arith.mulf %79, %80 : vector<32x128xf32>
    %cst_41 = arith.constant 0.000000e+00 : f32
    %82 = vector.broadcast %cst_41 : f32 to vector<32x128xf32>
    %83 = arith.cmpf oge, %78, %82 : vector<32x128xf32>
    %cst_42 = arith.constant 0.00999999977 : f32
    %84 = vector.broadcast %cst_42 : f32 to vector<32x128xf32>
    %85 = arith.mulf %84, %78 : vector<32x128xf32>
    %86 = arith.select %83, %78, %85 : vector<32x128xi1>, vector<32x128xf32>
    %c0_43 = arith.constant 0 : index
    %c0_44 = arith.constant 0 : index
    %87 = vector.load %arg8[%c0_43, %c0_44] : memref<96x128xf32, #tpu.memory_space<vmem>>, vector<32x128xf32>
    tpu.vector_store %arg8[%c0_43, %c0_44], %86 {strides = array<i32>} : memref<96x128xf32, #tpu.memory_space<vmem>>, vector<32x128xf32>,
    %cst_45 = arith.constant 0.000000e+00 : f32
    %88 = vector.broadcast %cst_45 : f32 to vector<32x128xf32>
    %89 = arith.cmpf oge, %81, %88 : vector<32x128xf32>
    %cst_46 = arith.constant 0.00999999977 : f32
    %90 = vector.broadcast %cst_46 : f32 to vector<32x128xf32>
    %91 = arith.mulf %90, %81 : vector<32x128xf32>
    %92 = arith.select %89, %81, %91 : vector<32x128xi1>, vector<32x128xf32>
    %c32 = arith.constant 32 : index
    %c0_47 = arith.constant 0 : index
    %93 = vector.load %arg8[%c32, %c0_47] : memref<96x128xf32, #tpu.memory_space<vmem>>, vector<32x128xf32>
    tpu.vector_store %arg8[%c32, %c0_47], %92 {strides = array<i32>} : memref<96x128xf32, #tpu.memory_space<vmem>>, vector<32x128xf32>,
    %cst_48 = arith.constant 0.000000e+00 : f32
    %94 = vector.broadcast %cst_48 : f32 to vector<32x128xf32>
    %95 = arith.cmpf oge, %79, %94 : vector<32x128xf32>
    %cst_49 = arith.constant 0.00999999977 : f32
    %96 = vector.broadcast %cst_49 : f32 to vector<32x128xf32>
    %97 = arith.mulf %96, %79 : vector<32x128xf32>
    %98 = arith.select %95, %79, %97 : vector<32x128xi1>, vector<32x128xf32>
    %c64 = arith.constant 64 : index
    %c0_50 = arith.constant 0 : index
    %99 = vector.load %arg8[%c64, %c0_50] : memref<96x128xf32, #tpu.memory_space<vmem>>, vector<32x128xf32>
    tpu.vector_store %arg8[%c64, %c0_50], %98 {strides = array<i32>} : memref<96x128xf32, #tpu.memory_space<vmem>>, vector<32x128xf32>,
    return
  }
  func.func @transform_0(%arg0: i32) -> (i32, i32) {
    %c0_i32 = arith.constant 0 : i32
    %c0_i32_0 = arith.constant 0 : i32
    return %c0_i32, %arg0 : i32, i32
  }
  func.func @transform_1(%arg0: i32) -> (i32, i32, i32) {
    %c0_i32 = arith.constant 0 : i32
    %c0_i32_0 = arith.constant 0 : i32
    %c0_i32_1 = arith.constant 0 : i32
    return %c0_i32, %c0_i32_0, %arg0 : i32, i32, i32
  }
  func.func @transform_2(%arg0: i32) -> (i32, i32) {
    %c0_i32 = arith.constant 0 : i32
    %c0_i32_0 = arith.constant 0 : i32
    %c0_i32_1 = arith.constant 0 : i32
    return %c0_i32, %c0_i32_0 : i32, i32
  }
  func.func @transform_3(%arg0: i32) -> (i32, i32) {
    %c0_i32 = arith.constant 0 : i32
    %c0_i32_0 = arith.constant 0 : i32
    %c0_i32_1 = arith.constant 0 : i32
    return %c0_i32, %c0_i32_0 : i32, i32
  }
  func.func @transform_4(%arg0: i32) -> (i32, i32) {
    %c0_i32 = arith.constant 0 : i32
    %c0_i32_0 = arith.constant 0 : i32
    %c0_i32_1 = arith.constant 0 : i32
    return %c0_i32, %c0_i32_0 : i32, i32
  }
  func.func @transform_5(%arg0: i32) -> (i32, i32) {
    %c0_i32 = arith.constant 0 : i32
    %c0_i32_0 = arith.constant 0 : i32
    %c0_i32_1 = arith.constant 0 : i32
    return %c0_i32, %c0_i32_0 : i32, i32
  }
  func.func @transform_6(%arg0: i32) -> (i32, i32) {
    %c0_i32 = arith.constant 0 : i32
    %c0_i32_0 = arith.constant 0 : i32
    %c0_i32_1 = arith.constant 0 : i32
    return %c0_i32, %c0_i32_0 : i32, i32
  }
  func.func @transform_7(%arg0: i32) -> (i32, i32) {
    %c0_i32 = arith.constant 0 : i32
    %c0_i32_0 = arith.constant 0 : i32
    return %c0_i32, %arg0 : i32, i32
  }
}

</mosaic_0001>

<llo_original>
// kernel: tpu_custom_call.1
$region0: #{tpu_custom_call.1}
  #allocation0 [shape = 'u32[]', space=smem, size = 0x4, offset = 0x4, fixed_abs, tag = 'smem constant byte address 0x4 - core index']
  #allocation1 [shape = 'u32[144,128]{1,0:T(1,128)}', space=vmem, size = 0x12000, scoped, tag = 'internal scratch']
  %s0 = inlined_call_operand.vmem [shape: f32[6,256], index: 0, kind: input, shape index: {}]
  %s1 = inlined_call_operand.vmem [shape: f32[8,6,256], index: 1, kind: input, shape index: {}]
  %s2 = inlined_call_operand.vmem [shape: f32[32,6], index: 2, kind: input, shape index: {}]
  %s3 = inlined_call_operand.vmem [shape: f32[32,6], index: 3, kind: input, shape index: {}]
  %s4 = inlined_call_operand.vmem [shape: f32[32,1], index: 4, kind: input, shape index: {}]
  %s5 = inlined_call_operand.vmem [shape: f32[32,32], index: 5, kind: input, shape index: {}]
  %s6 = inlined_call_operand.vmem [shape: f32[32,1], index: 6, kind: input, shape index: {}]
  %s7 = inlined_call_operand.hbm [shape: f32[96,256], index: 7, kind: output, shape index: {}]
  %s8 = sld [smem:[#allocation0]]
  $region99: #{tpu_custom_call.1} parent=0
    _
  %s10 = ssub.s32 1, %s8
  %s11 = scalar_select 0, %s10, %s8
  $region1: #{tpu_custom_call.1} parent=0
    #allocation2 [shape = 'u8[65536]{0}', space=vmem, size = 0x10000, scoped, tag = 'input window, operand 1']
    #allocation3 [shape = 'u8[98304]{0}', space=vmem, size = 0x18000, scoped, tag = 'output window, operand 0']
    #allocation4 [shape = 's32[2]{0}', space=sflag, size = 0x8, scoped, tag = 'scoped memory for tpu_custom_call.1']
    %12 = vsyncpa [#allocation4], 0
    %s13 = scalar_lea.sflag [#allocation4], 1
    %14 = vsyncpa %s13, 0
    loop: start=0, step=1, limit=4
    $region2: #{tpu_custom_call.1} parent=1 // loop_pre_header
      _
    $region3: #{tpu_custom_call.1} parent=1 // loop_header
      %s16 = sphi 0, %s20
      %p17 = scmp.ge.s32.totalorder %s16, 4
      %s26 = sphi 0, %s28
      %s29 = sphi 0, %s26
      %s30 = sphi 0, %s29
      %s46 = sphi 0, %s30
      %s52 = sphi 0, %s54
      %s55 = sphi 0, %s52
      %s56 = sphi 0, %s55
      %s72 = sphi 0, %s56
      %s76 = sphi 0, %s76
      %s78 = sphi 0, %s76
      %s79 = sphi 0, %s78
      %s93 = sphi 0, %s79
      %s97 = sphi 0, %s97
      %s99 = sphi 0, %s97
      %s100 = sphi 0, %s99
      %s114 = sphi 0, %s100
      %s118 = sphi 0, %s118
      %s120 = sphi 0, %s118
      %s121 = sphi 0, %s120
      %s135 = sphi 0, %s121
      %s139 = sphi 0, %s139
      %s141 = sphi 0, %s139
      %s142 = sphi 0, %s141
      %s156 = sphi 0, %s142
      %s160 = sphi 0, %s160
      %s162 = sphi 0, %s160
      %s163 = sphi 0, %s162
      %s177 = sphi 0, %s163
      %s183 = sphi 0, %s185
      %s186 = sphi 0, %s183
      %s187 = sphi 0, %s186
      %s203 = sphi 0, %s187
    $region4: #{tpu_custom_call.1} parent=1 // loop_header_branch
      %19 = sbr.rel (%p17) target = $region8
    $region5: #{tpu_custom_call.1} parent=1 // loop_body
      %s21 = ssub.s32 %s16, 1
      %s22 = ssub.s32 %s16, 2
      %s23 = sadd.s32 %s16, 1
      %s24 = ssub.s32 %s16, %s23
      %p25 = scmp.eq.s32.totalorder %s24, 0
      %s27 = sadd.s32 %s26, 1
      %s28 = scalar_select %p25, %s26, %s27
      %p31 = pneg %p25
      %p32 = scmp.eq.s32.totalorder %s16, 1
      %p33 = por %p31, %p32
      %p34 = scmp.ne.s32.totalorder %s26, %s29
      %p35 = scmp.eq.s32.totalorder %s16, 0
      %p36 = por %p34, %p35
      %p37 = scmp.ne.s32.totalorder %s26, %s29
      %p38 = scmp.eq.s32.totalorder %s21, 1
      %p39 = por %p37, %p38
      %p40 = scmp.ne.s32.totalorder %s29, %s30
      %p41 = scmp.eq.s32.totalorder %s21, 0
      %p42 = por %p40, %p41
      %p43 = scmp.ne.s32.totalorder %s29, %s30
      %p44 = scmp.eq.s32.totalorder %s22, 1
      %p45 = por %p43, %p44
      %p47 = scmp.ne.s32.totalorder %s30, %s46
      %p48 = scmp.eq.s32.totalorder %s22, 0
      %p49 = por %p47, %p48
      %s50 = ssub.s32 %s16, %s23
      %p51 = scmp.eq.s32.totalorder %s50, 0
      %s53 = sadd.s32 %s52, 1
      %s54 = scalar_select %p51, %s52, %s53
      %p57 = pneg %p51
      %p58 = scmp.eq.s32.totalorder %s16, 1
      %p59 = por %p57, %p58
      %p60 = scmp.ne.s32.totalorder %s52, %s55
      %p61 = scmp.eq.s32.totalorder %s16, 0
      %p62 = por %p60, %p61
      %p63 = scmp.ne.s32.totalorder %s52, %s55
      %p64 = scmp.eq.s32.totalorder %s21, 1
      %p65 = por %p63, %p64
      %p66 = scmp.ne.s32.totalorder %s55, %s56
      %p67 = scmp.eq.s32.totalorder %s21, 0
      %p68 = por %p66, %p67
      %p69 = scmp.ne.s32.totalorder %s55, %s56
      %p70 = scmp.eq.s32.totalorder %s22, 1
      %p71 = por %p69, %p70
      %p73 = scmp.ne.s32.totalorder %s56, %s72
      %p74 = scmp.eq.s32.totalorder %s22, 0
      %p75 = por %p73, %p74
      %s77 = sadd.s32 %s76, 1
      %p80 = scmp.eq.s32.totalorder %s16, 1
      %p81 = scmp.ne.s32.totalorder %s76, %s78
      %p82 = scmp.eq.s32.totalorder %s16, 0
      %p83 = por %p81, %p82
      %p84 = scmp.ne.s32.totalorder %s76, %s78
      %p85 = scmp.eq.s32.totalorder %s21, 1
      %p86 = por %p84, %p85
      %p87 = scmp.ne.s32.totalorder %s78, %s79
      %p88 = scmp.eq.s32.totalorder %s21, 0
      %p89 = por %p87, %p88
      %p90 = scmp.ne.s32.totalorder %s78, %s79
      %p91 = scmp.eq.s32.totalorder %s22, 1
      %p92 = por %p90, %p91
      %p94 = scmp.ne.s32.totalorder %s79, %s93
      %p95 = scmp.eq.s32.totalorder %s22, 0
      %p96 = por %p94, %p95
      %s98 = sadd.s32 %s97, 1
      %p101 = scmp.eq.s32.totalorder %s16, 1
      %p102 = scmp.ne.s32.totalorder %s97, %s99
      %p103 = scmp.eq.s32.totalorder %s16, 0
      %p104 = por %p102, %p103
      %p105 = scmp.ne.s32.totalorder %s97, %s99
      %p106 = scmp.eq.s32.totalorder %s21, 1
      %p107 = por %p105, %p106
      %p108 = scmp.ne.s32.totalorder %s99, %s100
      %p109 = scmp.eq.s32.totalorder %s21, 0
      %p110 = por %p108, %p109
      %p111 = scmp.ne.s32.totalorder %s99, %s100
      %p112 = scmp.eq.s32.totalorder %s22, 1
      %p113 = por %p111, %p112
      %p115 = scmp.ne.s32.totalorder %s100, %s114
      %p116 = scmp.eq.s32.totalorder %s22, 0
      %p117 = por %p115, %p116
      %s119 = sadd.s32 %s118, 1
      %p122 = scmp.eq.s32.totalorder %s16, 1
      %p123 = scmp.ne.s32.totalorder %s118, %s120
      %p124 = scmp.eq.s32.totalorder %s16, 0
      %p125 = por %p123, %p124
      %p126 = scmp.ne.s32.totalorder %s118, %s120
      %p127 = scmp.eq.s32.totalorder %s21, 1
      %p128 = por %p126, %p127
      %p129 = scmp.ne.s32.totalorder %s120, %s121
      %p130 = scmp.eq.s32.totalorder %s21, 0
      %p131 = por %p129, %p130
      %p132 = scmp.ne.s32.totalorder %s120, %s121
      %p133 = scmp.eq.s32.totalorder %s22, 1
      %p134 = por %p132, %p133
      %p136 = scmp.ne.s32.totalorder %s121, %s135
      %p137 = scmp.eq.s32.totalorder %s22, 0
      %p138 = por %p136, %p137
      %s140 = sadd.s32 %s139, 1
      %p143 = scmp.eq.s32.totalorder %s16, 1
      %p144 = scmp.ne.s32.totalorder %s139, %s141
      %p145 = scmp.eq.s32.totalorder %s16, 0
      %p146 = por %p144, %p145
      %p147 = scmp.ne.s32.totalorder %s139, %s141
      %p148 = scmp.eq.s32.totalorder %s21, 1
      %p149 = por %p147, %p148
      %p150 = scmp.ne.s32.totalorder %s141, %s142
      %p151 = scmp.eq.s32.totalorder %s21, 0
      %p152 = por %p150, %p151
      %p153 = scmp.ne.s32.totalorder %s141, %s142
      %p154 = scmp.eq.s32.totalorder %s22, 1
      %p155 = por %p153, %p154
      %p157 = scmp.ne.s32.totalorder %s142, %s156
      %p158 = scmp.eq.s32.totalorder %s22, 0
      %p159 = por %p157, %p158
      %s161 = sadd.s32 %s160, 1
      %p164 = scmp.eq.s32.totalorder %s16, 1
      %p165 = scmp.ne.s32.totalorder %s160, %s162
      %p166 = scmp.eq.s32.totalorder %s16, 0
      %p167 = por %p165, %p166
      %p168 = scmp.ne.s32.totalorder %s160, %s162
      %p169 = scmp.eq.s32.totalorder %s21, 1
      %p170 = por %p168, %p169
      %p171 = scmp.ne.s32.totalorder %s162, %s163
      %p172 = scmp.eq.s32.totalorder %s21, 0
      %p173 = por %p171, %p172
      %p174 = scmp.ne.s32.totalorder %s162, %s163
      %p175 = scmp.eq.s32.totalorder %s22, 1
      %p176 = por %p174, %p175
      %p178 = scmp.ne.s32.totalorder %s163, %s177
      %p179 = scmp.eq.s32.totalorder %s22, 0
      %p180 = por %p178, %p179
      %s181 = ssub.s32 %s16, %s23
      %p182 = scmp.eq.s32.totalorder %s181, 0
      %s184 = sadd.s32 %s183, 1
      %s185 = scalar_select %p182, %s183, %s184
      %p188 = pneg %p182
      %p189 = scmp.eq.s32.totalorder %s16, 1
      %p190 = por %p188, %p189
      %p191 = scmp.ne.s32.totalorder %s183, %s186
      %p192 = scmp.eq.s32.totalorder %s16, 0
      %p193 = por %p191, %p192
      %p194 = scmp.ne.s32.totalorder %s183, %s186
      %p195 = scmp.eq.s32.totalorder %s21, 1
      %p196 = por %p194, %p195
      %p197 = scmp.ne.s32.totalorder %s186, %s187
      %p198 = scmp.eq.s32.totalorder %s21, 0
      %p199 = por %p197, %p198
      %p200 = scmp.ne.s32.totalorder %s186, %s187
      %p201 = scmp.eq.s32.totalorder %s22, 1
      %p202 = por %p200, %p201
      %p204 = scmp.ne.s32.totalorder %s187, %s203
      %p205 = scmp.eq.s32.totalorder %s22, 0
      %p206 = por %p204, %p205
      %p207 = scmp.le.s32.totalorder 1, %s16
      %p208 = scmp.lt.s32.totalorder %s16, 3
      %p209 = pnand %p207, %p208
      %p210 = pneg %p209
      // Predicated region
      $region9: #{tpu_custom_call.1} parent=5 // pred_check
        _
      $region10: #{tpu_custom_call.1} parent=5 // pred_check_branch
        %212 = sbr.rel (%p209) target = $region12
      $region11: #{tpu_custom_call.1} parent=5 // pred_region
        %s213 = ssub.s32 %s16, 1
        // Predicated region
        $region13: #{tpu_custom_call.1} parent=11 // pred_check
          %p214 = pneg %p89
        $region14: #{tpu_custom_call.1} parent=11 // pred_check_branch
          %216 = sbr.rel (%p214) target = $region16
        $region15: #{tpu_custom_call.1} parent=11 // pred_region
          _
        $region16: #{tpu_custom_call.1} parent=11 // pred_fallthru
          _
        // Predicated region
        $region17: #{tpu_custom_call.1} parent=11 // pred_check
          %p217 = pneg %p110
        $region18: #{tpu_custom_call.1} parent=11 // pred_check_branch
          %219 = sbr.rel (%p217) target = $region20
        $region19: #{tpu_custom_call.1} parent=11 // pred_region
          _
        $region20: #{tpu_custom_call.1} parent=11 // pred_fallthru
          _
        // Predicated region
        $region21: #{tpu_custom_call.1} parent=11 // pred_check
          %p220 = pneg %p131
        $region22: #{tpu_custom_call.1} parent=11 // pred_check_branch
          %222 = sbr.rel (%p220) target = $region24
        $region23: #{tpu_custom_call.1} parent=11 // pred_region
          _
        $region24: #{tpu_custom_call.1} parent=11 // pred_fallthru
          _
        // Predicated region
        $region25: #{tpu_custom_call.1} parent=11 // pred_check
          %p223 = pneg %p152
        $region26: #{tpu_custom_call.1} parent=11 // pred_check_branch
          %225 = sbr.rel (%p223) target = $region28
        $region27: #{tpu_custom_call.1} parent=11 // pred_region
          _
        $region28: #{tpu_custom_call.1} parent=11 // pred_fallthru
          _
        // Predicated region
        $region29: #{tpu_custom_call.1} parent=11 // pred_check
          %p226 = pneg %p173
        $region30: #{tpu_custom_call.1} parent=11 // pred_check_branch
          %228 = sbr.rel (%p226) target = $region32
        $region31: #{tpu_custom_call.1} parent=11 // pred_region
          _
        $region32: #{tpu_custom_call.1} parent=11 // pred_fallthru
          _
      $region12: #{tpu_custom_call.1} parent=5 // pred_fallthru
        _
      %p229 = scmp.lt.s32.totalorder %s16, 2
      // Predicated region
      $region33: #{tpu_custom_call.1} parent=5 // pred_check
        %p230 = pneg %p229
      $region34: #{tpu_custom_call.1} parent=5 // pred_check_branch
        %232 = sbr.rel (%p230) target = $region36
      $region35: #{tpu_custom_call.1} parent=5 // pred_region
        // Predicated region
        $region37: #{tpu_custom_call.1} parent=35 // pred_check
          %p233 = pneg %p36
        $region38: #{tpu_custom_call.1} parent=35 // pred_check_branch
          %235 = sbr.rel (%p233) target = $region40
        $region39: #{tpu_custom_call.1} parent=35 // pred_region
          %p236 = scmp.lt.s32.totalorder %s16, 1
          %s237 = scalar_select %p236, %s16, 1
          %s238 = smul.addr %s237, 8
          %s239 = scalar_lea.vmem %s0, %s238
        $region40: #{tpu_custom_call.1} parent=35 // pred_fallthru
          _
        // Predicated region
        $region41: #{tpu_custom_call.1} parent=35 // pred_check
          %p240 = pneg %p62
        $region42: #{tpu_custom_call.1} parent=35 // pred_check_branch
          %242 = sbr.rel (%p240) target = $region44
        $region43: #{tpu_custom_call.1} parent=35 // pred_region
          %s243 = sand.u32 %s52, 1
          %s244 = sand.u32 %s52, 1
          %s245 = smul.addr %s244, 64
          %s246 = scalar_lea.vmem [#allocation2], %s245
          %s247 = smul.addr %s16, 8
          %s248 = scalar_lea.vmem %s1, %s247
          // Predicated region
          $region45: #{tpu_custom_call.1} parent=43 // pred_check
            _
          $region46: #{tpu_custom_call.1} parent=43 // pred_check_branch
            %250 = sbr.rel (0) target = $region48
          $region47: #{tpu_custom_call.1} parent=43 // pred_region
            // Predicated region
            $region49: #{tpu_custom_call.1} parent=47 // pred_check
              _
            $region50: #{tpu_custom_call.1} parent=47 // pred_check_branch
              %252 = sbr.rel (0) target = $region52
            $region51: #{tpu_custom_call.1} parent=47 // pred_region
              // Predicated region
              $region64: #{tpu_custom_call.1} parent=51 // pred_check
                _
              $region65: #{tpu_custom_call.1} parent=51 // pred_check_branch
                %281 = sbr.rel (0) target = $region67
              $region66: #{tpu_custom_call.1} parent=51 // pred_region
                loop: start=0, step=1, limit=1
                $region68: #{tpu_custom_call.1} parent=66 // loop_pre_header
                  _
                $region69: #{tpu_custom_call.1} parent=66 // loop_header
                  %s283 = sphi 0, %s287
                  %p284 = scmp.ge.s32.totalorder %s283, 1
                  %s288 = sphi %s248, %s248
                  %s289 = sphi %s246, %s246
                $region70: #{tpu_custom_call.1} parent=66 // loop_header_branch
                  %286 = sbr.rel (%p284) target = $region74
                $region71: #{tpu_custom_call.1} parent=66 // loop_body
                  %v290 = vld [vmem:[%s288] sm:$0xff]
                  %291 = vst [vmem:[%s289] sm:$0xff] %v290
                  %v292 = vld [vmem:[%s288 + $0x10] sm:$0xff]
                  %293 = vst [vmem:[%s289 + $0x8] sm:$0xff] %v292
                  %v294 = vld [vmem:[%s288 + $0x20] sm:$0xff]
                  %295 = vst [vmem:[%s289 + $0x10] sm:$0xff] %v294
                  %v296 = vld [vmem:[%s288 + $0x30] sm:$0xff]
                  %297 = vst [vmem:[%s289 + $0x18] sm:$0xff] %v296
                  %v298 = vld [vmem:[%s288 + $0x40] sm:$0xff]
                  %299 = vst [vmem:[%s289 + $0x20] sm:$0xff] %v298
                  %v300 = vld [vmem:[%s288 + $0x50] sm:$0xff]
                  %301 = vst [vmem:[%s289 + $0x28] sm:$0xff] %v300
                  %v302 = vld [vmem:[%s288 + $0x60] sm:$0xff]
                  %303 = vst [vmem:[%s289 + $0x30] sm:$0xff] %v302
                  %v304 = vld [vmem:[%s288 + $0x70] sm:$0xff]
                  %305 = vst [vmem:[%s289 + $0x38] sm:$0xff] %v304
                $region72: #{tpu_custom_call.1} parent=66 // loop_footer
                  %s287 = sadd.s32 1, %s283
                $region73: #{tpu_custom_call.1} parent=66 // loop_footer_branch
                  %282 = sbr.rel target = $region69
                $region74: #{tpu_custom_call.1} parent=66 // loop_exit
                  _
              $region67: #{tpu_custom_call.1} parent=51 // pred_fallthru
                _
              // Predicated region
              $region75: #{tpu_custom_call.1} parent=51 // pred_check
                _
              $region76: #{tpu_custom_call.1} parent=51 // pred_check_branch
                %307 = sbr.rel target = $region78
              $region77: #{tpu_custom_call.1} parent=51 // pred_region
                _
              $region78: #{tpu_custom_call.1} parent=51 // pred_fallthru
                _
            $region52: #{tpu_custom_call.1} parent=47 // pred_fallthru
              _
            // Predicated region
            $region53: #{tpu_custom_call.1} parent=47 // pred_check
              _
            $region54: #{tpu_custom_call.1} parent=47 // pred_check_branch
              %254 = sbr.rel target = $region56
            $region55: #{tpu_custom_call.1} parent=47 // pred_region
              loop: start=0, step=1, limit=1
              $region57: #{tpu_custom_call.1} parent=55 // loop_pre_header
                _
              $region58: #{tpu_custom_call.1} parent=55 // loop_header
                %s257 = sphi 0, %s261
                %p258 = scmp.ge.s32.totalorder %s257, 1
                %s262 = sphi %s248, %s248
                %s263 = sphi %s246, %s246
              $region59: #{tpu_custom_call.1} parent=55 // loop_header_branch
                %260 = sbr.rel (%p258) target = $region63
              $region60: #{tpu_custom_call.1} parent=55 // loop_body
                %v264 = vld [vmem:[%s262] sm:$0xff]
                %265 = vst [vmem:[%s263] sm:$0xff] %v264
                %v266 = vld [vmem:[%s262 + $0x10] sm:$0xff]
                %267 = vst [vmem:[%s263 + $0x8] sm:$0xff] %v266
                %v268 = vld [vmem:[%s262 + $0x20] sm:$0xff]
                %269 = vst [vmem:[%s263 + $0x10] sm:$0xff] %v268
                %v270 = vld [vmem:[%s262 + $0x30] sm:$0xff]
                %271 = vst [vmem:[%s263 + $0x18] sm:$0xff] %v270
                %v272 = vld [vmem:[%s262 + $0x40] sm:$0xff]
                %273 = vst [vmem:[%s263 + $0x20] sm:$0xff] %v272
                %v274 = vld [vmem:[%s262 + $0x50] sm:$0xff]
                %275 = vst [vmem:[%s263 + $0x28] sm:$0xff] %v274
                %v276 = vld [vmem:[%s262 + $0x60] sm:$0xff]
                %277 = vst [vmem:[%s263 + $0x30] sm:$0xff] %v276
                %v278 = vld [vmem:[%s262 + $0x70] sm:$0xff]
                %279 = vst [vmem:[%s263 + $0x38] sm:$0xff] %v278
              $region61: #{tpu_custom_call.1} parent=55 // loop_footer
                %s261 = sadd.s32 1, %s257
              $region62: #{tpu_custom_call.1} parent=55 // loop_footer_branch
                %256 = sbr.rel target = $region58
              $region63: #{tpu_custom_call.1} parent=55 // loop_exit
                _
            $region56: #{tpu_custom_call.1} parent=47 // pred_fallthru
              _
          $region48: #{tpu_custom_call.1} parent=43 // pred_fallthru
            _
          %308 = vnop
        $region44: #{tpu_custom_call.1} parent=35 // pred_fallthru
          _
      $region36: #{tpu_custom_call.1} parent=5 // pred_fallthru
        _
      %p309 = scmp.le.s32.totalorder 1, %s16
      %p310 = scmp.lt.s32.totalorder %s16, 3
      %p311 = pnand %p309, %p310
      %p312 = pneg %p311
      // Predicated region
      $region79: #{tpu_custom_call.1} parent=5 // pred_check
        _
      $region80: #{tpu_custom_call.1} parent=5 // pred_check_branch
        %314 = sbr.rel (%p311) target = $region82
      $region81: #{tpu_custom_call.1} parent=5 // pred_region
        %s315 = ssub.s32 %s16, 1
        %s316 = sand.u32 %s55, 1
        %s317 = sand.u32 %s55, 1
        %s318 = smul.addr %s317, 64
        %s319 = scalar_lea.vmem [#allocation2], %s318
        // Predicated region
        $region83: #{tpu_custom_call.1} parent=81 // pred_check
          %p320 = pneg %p68
        $region84: #{tpu_custom_call.1} parent=81 // pred_check_branch
          %322 = sbr.rel (%p320) target = $region86
        $region85: #{tpu_custom_call.1} parent=81 // pred_region
          _
        $region86: #{tpu_custom_call.1} parent=81 // pred_fallthru
          _
        %p323 = scmp.lt.s32.totalorder %s21, 1
        %s324 = scalar_select %p323, %s21, 1
        %s325 = smul.addr %s324, 8
        %s326 = scalar_lea.vmem %s0, %s325
        %p327 = pneg %p42
        %p328 = pneg %p39
        %s329 = sand.u32 %s55, 1
        %s330 = sand.u32 %s55, 1
        %s331 = smul.addr %s330, 64
        %s332 = scalar_lea.vmem [#allocation2], %s331
        %p333 = pneg %p68
        %p334 = pneg %p65
        %p335 = pneg %p89
        %p336 = pneg %p86
        %p337 = pneg %p110
        %p338 = pneg %p107
        %p339 = pneg %p131
        %p340 = pneg %p128
        %p341 = pneg %p152
        %p342 = pneg %p149
        %p343 = pneg %p173
        %p344 = pneg %p170
        %p345 = pneg %p199
        %p346 = pneg %p196
        %s347 = sand.u32 %s186, 1
        %s348 = scalar_lea.sflag [#allocation4], %s347
        %s349 = sand.u32 %s186, 1
        %s350 = smul.addr %s349, 96
        %s351 = scalar_lea.vmem [#allocation3], %s350
        %p352 = scmp.lt.s32.totalorder %s21, 1
        %s353 = scalar_select %p352, %s21, 1
        %s354 = smul.addr %s353, 8
        %s355 = scalar_lea.vmem %s0, %s354
        %v356 = vld [vmem:[%s355] sm:$0x3f]
        %v357 = vld [vmem:[%s2] sm:$0xff]
        %v358 = vld [vmem:[%s2 + $0x8] sm:$0xff]
        %v359 = vld [vmem:[%s2 + $0x10] sm:$0xff]
        %v360 = vld [vmem:[%s2 + $0x18] sm:$0xff]
        %v361 = vld [vmem:[%s3] sm:$0xff]
        %v362 = vld [vmem:[%s3 + $0x8] sm:$0xff]
        %v363 = vld [vmem:[%s3 + $0x10] sm:$0xff]
        %v364 = vld [vmem:[%s3 + $0x18] sm:$0xff]
        %v365 = vld [vmem:[%s4] sm:$0xff]
        %v366 = vld [vmem:[%s4 + $0x8] sm:$0xff]
        %v367 = vld [vmem:[%s4 + $0x10] sm:$0xff]
        %v368 = vld [vmem:[%s4 + $0x18] sm:$0xff]
        %v369 = vld [vmem:[%s5] sm:$0xff]
        %v370 = vld [vmem:[%s5 + $0x8] sm:$0xff]
        %v371 = vld [vmem:[%s5 + $0x10] sm:$0xff]
        %v372 = vld [vmem:[%s5 + $0x18] sm:$0xff]
        %v373 = vld [vmem:[%s6] sm:$0xff]
        %v374 = vld [vmem:[%s6 + $0x8] sm:$0xff]
        %v375 = vld [vmem:[%s6 + $0x10] sm:$0xff]
        %v376 = vld [vmem:[%s6 + $0x18] sm:$0xff]
        %378 = vset.pattern.permute.xlu0 0
        %379 = vperm.xlu0 %378, %v365
        %v380 = vpop.permute.xlu0 %379
        %383 = vset.pattern.permute.xlu0 0
        %384 = vperm.xlu0 %383, %v366
        %v385 = vpop.permute.xlu0 %384
        %388 = vset.pattern.permute.xlu0 0
        %389 = vperm.xlu0 %388, %v367
        %v390 = vpop.permute.xlu0 %389
        %393 = vset.pattern.permute.xlu0 0
        %394 = vperm.xlu0 %393, %v368
        %v395 = vpop.permute.xlu0 %394
        %vm397 = vcmask 48128
        %v399 = vsel %vm397, %v357, 0
        %v402 = vsel %vm397, %v358, 0
        %v405 = vsel %vm397, %v359, 0
        %v408 = vsel %vm397, %v360, 0
        %vm410 = vcmask 1045504
        %v412 = vsel %vm410, %v356, 0
        %414 = vmatprep.subr.mxu0 0.0
        %415 = vmatpush1.msra.mxu0 %v412
        %416 = vmatprep.subr.mxu0 0.0
        %417 = vmatpush1.msra.mxu0 0.0
        %418 = vmatprep.subr.mxu0 0.0
        %419 = vmatpush1.msra.mxu0 0.0
        %420 = vmatprep.subr.mxu0 0.0
        %421 = vmatpush1.msra.mxu0 0.0
        %422 = vmatprep.subr.mxu0 0.0
        %423 = vmatpush1.msra.mxu0 0.0
        %424 = vmatprep.subr.mxu0 0.0
        %425 = vmatpush1.msra.mxu0 0.0
        %426 = vmatprep.subr.mxu0 0.0
        %427 = vmatpush1.msra.mxu0 0.0
        %428 = vmatprep.subr.mxu0 0.0
        %429 = vmatpush1.msra.mxu0 0.0
        %430 = vmatprep.subr.mxu0 0.0
        %431 = vmatpush1.msra.mxu0 0.0
        %432 = vmatprep.subr.mxu0 0.0
        %433 = vmatpush1.msra.mxu0 0.0
        %434 = vmatprep.subr.mxu0 0.0
        %435 = vmatpush1.msra.mxu0 0.0
        %436 = vmatprep.subr.mxu0 0.0
        %437 = vmatpush1.msra.mxu0 0.0
        %438 = vmatprep.subr.mxu0 0.0
        %439 = vmatpush1.msra.mxu0 0.0
        %440 = vmatprep.subr.mxu0 0.0
        %441 = vmatpush1.msra.mxu0 0.0
        %442 = vmatprep.subr.mxu0 0.0
        %443 = vmatpush1.msra.mxu0 0.0
        %444 = vmatprep.subr.mxu0 0.0
        %445 = vmatpush1.msra.mxu0 0.0
        %446 = vmatprep.subr.mxu0 0.0
        %447 = vmatpush1.msra.mxu0 0.0
        %448 = vmatprep.subr.mxu0 0.0
        %449 = vmatpush1.msra.mxu0 0.0
        %450 = vmatprep.subr.mxu0 0.0
        %451 = vmatpush1.msra.mxu0 0.0
        %452 = vmatprep.subr.mxu0 0.0
        %453 = vmatpush1.msra.mxu0 0.0
        %454 = vmatprep.subr.mxu0 0.0
        %455 = vmatpush1.msra.mxu0 0.0
        %456 = vmatprep.subr.mxu0 0.0
        %457 = vmatpush1.msra.mxu0 0.0
        %458 = vmatprep.subr.mxu0 0.0
        %459 = vmatpush1.msra.mxu0 0.0
        %460 = vmatprep.subr.mxu0 0.0
        %461 = vmatpush1.msra.mxu0 0.0
        %462 = vmatprep.subr.mxu0 0.0
        %463 = vmatpush1.msra.mxu0 0.0
        %464 = vmatprep.subr.mxu0 0.0
        %465 = vmatpush1.msra.mxu0 0.0
        %466 = vmatprep.subr.mxu0 0.0
        %467 = vmatpush1.msra.mxu0 0.0
        %468 = vmatprep.subr.mxu0 0.0
        %469 = vmatpush1.msra.mxu0 0.0
        %470 = vmatprep.subr.mxu0 0.0
        %471 = vmatpush1.msra.mxu0 0.0
        %472 = vmatprep.subr.mxu0 0.0
        %473 = vmatpush1.msra.mxu0 0.0
        %474 = vmatprep.subr.mxu0 0.0
        %475 = vmatpush1.msra.mxu0 0.0
        %476 = vmatprep.subr.mxu0 0.0
        %477 = vmatpush1.msra.mxu0 0.0
        %478 = vmatprep.mubr.f32.mxu0 0.0
        %479 = vmatmul.mubr.f32.gmra.mrb[0].mxu0 %v399
        %v480 = vpop.f32.mrb[0].mxu0
        %v481 = vadd.f32 %v380, %v480
        %v482 = vpop.f32.mrb[0].mxu0
        %483 = vmatprep.mubr.f32.mxu0 0.0
        %484 = vmatmul.mubr.f32.gmra.mrb[0].mxu0 %v402
        %v485 = vpop.f32.mrb[0].mxu0
        %v486 = vadd.f32 %v385, %v485
        %v487 = vpop.f32.mrb[0].mxu0
        %488 = vmatprep.mubr.f32.mxu0 0.0
        %489 = vmatmul.mubr.f32.gmra.mrb[0].mxu0 %v405
        %v490 = vpop.f32.mrb[0].mxu0
        %v491 = vadd.f32 %v390, %v490
        %v492 = vpop.f32.mrb[0].mxu0
        %493 = vmatprep.mubr.f32.mxu0 0.0
        %494 = vmatmul.mubr.f32.gmra.mrb[0].mxu0 %v408
        %v495 = vpop.f32.mrb[0].mxu0
        %v496 = vadd.f32 %v395, %v495
        %v497 = vpop.f32.mrb[0].mxu0
        %498 = vdwg.mxu0
        %500 = vset.pattern.permute.xlu0 0
        %501 = vperm.xlu0 %500, %v373
        %v502 = vpop.permute.xlu0 %501
        %505 = vset.pattern.permute.xlu0 0
        %506 = vperm.xlu0 %505, %v374
        %v507 = vpop.permute.xlu0 %506
        %510 = vset.pattern.permute.xlu0 0
        %511 = vperm.xlu0 %510, %v375
        %v512 = vpop.permute.xlu0 %511
        %515 = vset.pattern.permute.xlu0 0
        %516 = vperm.xlu0 %515, %v376
        %v517 = vpop.permute.xlu0 %516
        %v519 = vld [vmem:[%s319] sm:$0x3f]
        %s520 = scalar_lea.vmem %s319, 8 [#allocation2]
        %v521 = vld [vmem:[%s520] sm:$0x3f]
        %s522 = scalar_lea.vmem %s319, 16 [#allocation2]
        %v523 = vld [vmem:[%s522] sm:$0x3f]
        %s524 = scalar_lea.vmem %s319, 24 [#allocation2]
        %v525 = vld [vmem:[%s524] sm:$0x3f]
        %v527 = vsel %vm397, %v361, 0
        %v530 = vsel %vm397, %v362, 0
        %v533 = vsel %vm397, %v363, 0
        %v536 = vsel %vm397, %v364, 0
        %v539 = vsel %vm410, %v519, 0
        %v542 = vsel %vm410, %v521, 0
        %v545 = vsel %vm410, %v523, 0
        %v548 = vsel %vm410, %v525, 0
        %550 = vmatprep.subr.mxu0 %v542
        %551 = vmatpush1.msra.mxu0 %v539
        %552 = vmatprep.subr.mxu0 0.0
        %553 = vmatpush1.msra.mxu0 0.0
        %554 = vmatprep.subr.mxu0 0.0
        %555 = vmatpush1.msra.mxu0 0.0
        %556 = vmatprep.subr.mxu0 0.0
        %557 = vmatpush1.msra.mxu0 0.0
        %558 = vmatprep.subr.mxu0 0.0
        %559 = vmatpush1.msra.mxu0 0.0
        %560 = vmatprep.subr.mxu0 0.0
        %561 = vmatpush1.msra.mxu0 0.0
        %562 = vmatprep.subr.mxu0 0.0
        %563 = vmatpush1.msra.mxu0 0.0
        %564 = vmatprep.subr.mxu0 0.0
        %565 = vmatpush1.msra.mxu0 0.0
        %566 = vmatprep.subr.mxu0 0.0
        %567 = vmatpush1.msra.mxu0 0.0
        %568 = vmatprep.subr.mxu0 0.0
        %569 = vmatpush1.msra.mxu0 0.0
        %570 = vmatprep.subr.mxu0 0.0
        %571 = vmatpush1.msra.mxu0 0.0
        %572 = vmatprep.subr.mxu0 0.0
        %573 = vmatpush1.msra.mxu0 0.0
        %574 = vmatprep.subr.mxu0 0.0
        %575 = vmatpush1.msra.mxu0 0.0
        %576 = vmatprep.subr.mxu0 0.0
        %577 = vmatpush1.msra.mxu0 0.0
        %578 = vmatprep.subr.mxu0 0.0
        %579 = vmatpush1.msra.mxu0 0.0
        %580 = vmatprep.subr.mxu0 0.0
        %581 = vmatpush1.msra.mxu0 0.0
        %582 = vmatprep.subr.mxu0 0.0
        %583 = vmatpush1.msra.mxu0 0.0
        %584 = vmatprep.subr.mxu0 0.0
        %585 = vmatpush1.msra.mxu0 0.0
        %586 = vmatprep.subr.mxu0 0.0
        %587 = vmatpush1.msra.mxu0 0.0
        %588 = vmatprep.subr.mxu0 0.0
        %589 = vmatpush1.msra.mxu0 0.0
        %590 = vmatprep.subr.mxu0 0.0
        %591 = vmatpush1.msra.mxu0 0.0
        %592 = vmatprep.subr.mxu0 0.0
        %593 = vmatpush1.msra.mxu0 0.0
        %594 = vmatprep.subr.mxu0 0.0
        %595 = vmatpush1.msra.mxu0 0.0
        %596 = vmatprep.subr.mxu0 0.0
        %597 = vmatpush1.msra.mxu0 0.0
        %598 = vmatprep.subr.mxu0 0.0
        %599 = vmatpush1.msra.mxu0 0.0
        %600 = vmatprep.subr.mxu0 0.0
        %601 = vmatpush1.msra.mxu0 0.0
        %602 = vmatprep.subr.mxu0 0.0
        %603 = vmatpush1.msra.mxu0 0.0
        %604 = vmatprep.subr.mxu0 0.0
        %605 = vmatpush1.msra.mxu0 0.0
        %606 = vmatprep.subr.mxu0 0.0
        %607 = vmatpush1.msra.mxu0 0.0
        %608 = vmatprep.subr.mxu0 0.0
        %609 = vmatpush1.msra.mxu0 0.0
        %610 = vmatprep.subr.mxu0 0.0
        %611 = vmatpush1.msra.mxu0 0.0
        %612 = vmatprep.subr.mxu0 0.0
        %613 = vmatpush1.msra.mxu0 0.0
        %614 = vmatprep.mubr.f32.mxu0 0.0
        %615 = vmatmul.mubr.f32.gmra.mrb[0].mxu0 %v527
        %v616 = vpop.f32.mrb[0].mxu0
        %v617 = vadd.f32 %v481, %v616
        %v618 = vpop.f32.mrb[0].mxu0
        %v619 = vadd.f32 %v481, %v618
        %620 = vmatprep.mubr.f32.mxu0 0.0
        %621 = vmatmul.mubr.f32.gmra.mrb[0].mxu0 %v530
        %v622 = vpop.f32.mrb[0].mxu0
        %v623 = vadd.f32 %v486, %v622
        %v624 = vpop.f32.mrb[0].mxu0
        %v625 = vadd.f32 %v486, %v624
        %626 = vmatprep.mubr.f32.mxu0 0.0
        %627 = vmatmul.mubr.f32.gmra.mrb[0].mxu0 %v533
        %v628 = vpop.f32.mrb[0].mxu0
        %v629 = vadd.f32 %v491, %v628
        %v630 = vpop.f32.mrb[0].mxu0
        %v631 = vadd.f32 %v491, %v630
        %632 = vmatprep.mubr.f32.mxu0 0.0
        %633 = vmatmul.mubr.f32.gmra.mrb[0].mxu0 %v536
        %v634 = vpop.f32.mrb[0].mxu0
        %v635 = vadd.f32 %v496, %v634
        %v636 = vpop.f32.mrb[0].mxu0
        %v637 = vadd.f32 %v496, %v636
        %638 = vdwg.mxu0
        %639 = vmatprep.subr.mxu0 %v548
        %640 = vmatpush1.msra.mxu0 %v545
        %641 = vmatprep.subr.mxu0 0.0
        %642 = vmatpush1.msra.mxu0 0.0
        %643 = vmatprep.subr.mxu0 0.0
        %644 = vmatpush1.msra.mxu0 0.0
        %645 = vmatprep.subr.mxu0 0.0
        %646 = vmatpush1.msra.mxu0 0.0
        %647 = vmatprep.subr.mxu0 0.0
        %648 = vmatpush1.msra.mxu0 0.0
        %649 = vmatprep.subr.mxu0 0.0
        %650 = vmatpush1.msra.mxu0 0.0
        %651 = vmatprep.subr.mxu0 0.0
        %652 = vmatpush1.msra.mxu0 0.0
        %653 = vmatprep.subr.mxu0 0.0
        %654 = vmatpush1.msra.mxu0 0.0
        %655 = vmatprep.subr.mxu0 0.0
        %656 = vmatpush1.msra.mxu0 0.0
        %657 = vmatprep.subr.mxu0 0.0
        %658 = vmatpush1.msra.mxu0 0.0
        %659 = vmatprep.subr.mxu0 0.0
        %660 = vmatpush1.msra.mxu0 0.0
        %661 = vmatprep.subr.mxu0 0.0
        %662 = vmatpush1.msra.mxu0 0.0
        %663 = vmatprep.subr.mxu0 0.0
        %664 = vmatpush1.msra.mxu0 0.0
        %665 = vmatprep.subr.mxu0 0.0
        %666 = vmatpush1.msra.mxu0 0.0
        %667 = vmatprep.subr.mxu0 0.0
        %668 = vmatpush1.msra.mxu0 0.0
        %669 = vmatprep.subr.mxu0 0.0
        %670 = vmatpush1.msra.mxu0 0.0
        %671 = vmatprep.subr.mxu0 0.0
        %672 = vmatpush1.msra.mxu0 0.0
        %673 = vmatprep.subr.mxu0 0.0
        %674 = vmatpush1.msra.mxu0 0.0
        %675 = vmatprep.subr.mxu0 0.0
        %676 = vmatpush1.msra.mxu0 0.0
        %677 = vmatprep.subr.mxu0 0.0
        %678 = vmatpush1.msra.mxu0 0.0
        %679 = vmatprep.subr.mxu0 0.0
        %680 = vmatpush1.msra.mxu0 0.0
        %681 = vmatprep.subr.mxu0 0.0
        %682 = vmatpush1.msra.mxu0 0.0
        %683 = vmatprep.subr.mxu0 0.0
        %684 = vmatpush1.msra.mxu0 0.0
        %685 = vmatprep.subr.mxu0 0.0
        %686 = vmatpush1.msra.mxu0 0.0
        %687 = vmatprep.subr.mxu0 0.0
        %688 = vmatpush1.msra.mxu0 0.0
        %689 = vmatprep.subr.mxu0 0.0
        %690 = vmatpush1.msra.mxu0 0.0
        %691 = vmatprep.subr.mxu0 0.0
        %692 = vmatpush1.msra.mxu0 0.0
        %693 = vmatprep.subr.mxu0 0.0
        %694 = vmatpush1.msra.mxu0 0.0
        %695 = vmatprep.subr.mxu0 0.0
        %696 = vmatpush1.msra.mxu0 0.0
        %697 = vmatprep.subr.mxu0 0.0
        %698 = vmatpush1.msra.mxu0 0.0
        %699 = vmatprep.subr.mxu0 0.0
        %700 = vmatpush1.msra.mxu0 0.0
        %701 = vmatprep.subr.mxu0 0.0
        %702 = vmatpush1.msra.mxu0 0.0
        %703 = vmatprep.mubr.f32.mxu0 0.0
        %704 = vmatmul.mubr.f32.gmra.mrb[0].mxu0 %v527
        %v705 = vpop.f32.mrb[0].mxu0
        %v706 = vadd.f32 %v481, %v705
        %v707 = vpop.f32.mrb[0].mxu0
        %v708 = vadd.f32 %v481, %v707
        %709 = vmatprep.mubr.f32.mxu0 0.0
        %710 = vmatmul.mubr.f32.gmra.mrb[0].mxu0 %v530
        %v711 = vpop.f32.mrb[0].mxu0
        %v712 = vadd.f32 %v486, %v711
        %v713 = vpop.f32.mrb[0].mxu0
        %v714 = vadd.f32 %v486, %v713
        %715 = vmatprep.mubr.f32.mxu0 0.0
        %716 = vmatmul.mubr.f32.gmra.mrb[0].mxu0 %v533
        %v717 = vpop.f32.mrb[0].mxu0
        %v718 = vadd.f32 %v491, %v717
        %v719 = vpop.f32.mrb[0].mxu0
        %v720 = vadd.f32 %v491, %v719
        %721 = vmatprep.mubr.f32.mxu0 0.0
        %722 = vmatmul.mubr.f32.gmra.mrb[0].mxu0 %v536
        %v723 = vpop.f32.mrb[0].mxu0
        %v724 = vadd.f32 %v496, %v723
        %v725 = vpop.f32.mrb[0].mxu0
        %v726 = vadd.f32 %v496, %v725
        %727 = vdwg.mxu0
        %vm728 = vcmp.ge.f32.partialorder %v617, 0.0
        %vm729 = vcmp.ge.f32.partialorder %v619, 0.0
        %vm730 = vcmp.ge.f32.partialorder %v706, 0.0
        %vm731 = vcmp.ge.f32.partialorder %v708, 0.0
        %vm732 = vcmp.ge.f32.partialorder %v623, 0.0
        %vm733 = vcmp.ge.f32.partialorder %v625, 0.0
        %vm734 = vcmp.ge.f32.partialorder %v712, 0.0
        %vm735 = vcmp.ge.f32.partialorder %v714, 0.0
        %vm736 = vcmp.ge.f32.partialorder %v629, 0.0
        %vm737 = vcmp.ge.f32.partialorder %v631, 0.0
        %vm738 = vcmp.ge.f32.partialorder %v718, 0.0
        %vm739 = vcmp.ge.f32.partialorder %v720, 0.0
        %vm740 = vcmp.ge.f32.partialorder %v635, 0.0
        %vm741 = vcmp.ge.f32.partialorder %v637, 0.0
        %vm742 = vcmp.ge.f32.partialorder %v724, 0.0
        %vm743 = vcmp.ge.f32.partialorder %v726, 0.0
        %v744 = vmul.f32 %v617, 0.01
        %v745 = vmul.f32 %v619, 0.01
        %v746 = vmul.f32 %v706, 0.01
        %v747 = vmul.f32 %v708, 0.01
        %v748 = vmul.f32 %v623, 0.01
        %v749 = vmul.f32 %v625, 0.01
        %v750 = vmul.f32 %v712, 0.01
        %v751 = vmul.f32 %v714, 0.01
        %v752 = vmul.f32 %v629, 0.01
        %v753 = vmul.f32 %v631, 0.01
        %v754 = vmul.f32 %v718, 0.01
        %v755 = vmul.f32 %v720, 0.01
        %v756 = vmul.f32 %v635, 0.01
        %v757 = vmul.f32 %v637, 0.01
        %v758 = vmul.f32 %v724, 0.01
        %v759 = vmul.f32 %v726, 0.01
        %v760 = vsel %vm728, %v617, %v744
        %v761 = vsel %vm729, %v619, %v745
        %v762 = vsel %vm730, %v706, %v746
        %v763 = vsel %vm731, %v708, %v747
        %v764 = vsel %vm732, %v623, %v748
        %v765 = vsel %vm733, %v625, %v749
        %v766 = vsel %vm734, %v712, %v750
        %v767 = vsel %vm735, %v714, %v751
        %v768 = vsel %vm736, %v629, %v752
        %v769 = vsel %vm737, %v631, %v753
        %v770 = vsel %vm738, %v718, %v754
        %v771 = vsel %vm739, %v720, %v755
        %v772 = vsel %vm740, %v635, %v756
        %v773 = vsel %vm741, %v637, %v757
        %v774 = vsel %vm742, %v724, %v758
        %v775 = vsel %vm743, %v726, %v759
        %vm776 = vcmask 261120
        %v778 = vsel %vm776, %v369, 0
        %v781 = vsel %vm776, %v370, 0
        %v784 = vsel %vm776, %v371, 0
        %v787 = vsel %vm776, %v372, 0
        %789 = vmatprep.subr.mxu0 %v761
        %790 = vmatpush1.msra.mxu0 %v760
        %791 = vmatprep.subr.mxu0 %v765
        %792 = vmatpush1.msra.mxu0 %v764
        %793 = vmatprep.subr.mxu0 %v769
        %794 = vmatpush1.msra.mxu0 %v768
        %795 = vmatprep.subr.mxu0 %v773
        %796 = vmatpush1.msra.mxu0 %v772
        %797 = vmatprep.subr.mxu0 0.0
        %798 = vmatpush1.msra.mxu0 0.0
        %799 = vmatprep.subr.mxu0 0.0
        %800 = vmatpush1.msra.mxu0 0.0
        %801 = vmatprep.subr.mxu0 0.0
        %802 = vmatpush1.msra.mxu0 0.0
        %803 = vmatprep.subr.mxu0 0.0
        %804 = vmatpush1.msra.mxu0 0.0
        %805 = vmatprep.subr.mxu0 0.0
        %806 = vmatpush1.msra.mxu0 0.0
        %807 = vmatprep.subr.mxu0 0.0
        %808 = vmatpush1.msra.mxu0 0.0
        %809 = vmatprep.subr.mxu0 0.0
        %810 = vmatpush1.msra.mxu0 0.0
        %811 = vmatprep.subr.mxu0 0.0
        %812 = vmatpush1.msra.mxu0 0.0
        %813 = vmatprep.subr.mxu0 0.0
        %814 = vmatpush1.msra.mxu0 0.0
        %815 = vmatprep.subr.mxu0 0.0
        %816 = vmatpush1.msra.mxu0 0.0
        %817 = vmatprep.subr.mxu0 0.0
        %818 = vmatpush1.msra.mxu0 0.0
        %819 = vmatprep.subr.mxu0 0.0
        %820 = vmatpush1.msra.mxu0 0.0
        %821 = vmatprep.subr.mxu0 0.0
        %822 = vmatpush1.msra.mxu0 0.0
        %823 = vmatprep.subr.mxu0 0.0
        %824 = vmatpush1.msra.mxu0 0.0
        %825 = vmatprep.subr.mxu0 0.0
        %826 = vmatpush1.msra.mxu0 0.0
        %827 = vmatprep.subr.mxu0 0.0
        %828 = vmatpush1.msra.mxu0 0.0
        %829 = vmatprep.subr.mxu0 0.0
        %830 = vmatpush1.msra.mxu0 0.0
        %831 = vmatprep.subr.mxu0 0.0
        %832 = vmatpush1.msra.mxu0 0.0
        %833 = vmatprep.subr.mxu0 0.0
        %834 = vmatpush1.msra.mxu0 0.0
        %835 = vmatprep.subr.mxu0 0.0
        %836 = vmatpush1.msra.mxu0 0.0
        %837 = vmatprep.subr.mxu0 0.0
        %838 = vmatpush1.msra.mxu0 0.0
        %839 = vmatprep.subr.mxu0 0.0
        %840 = vmatpush1.msra.mxu0 0.0
        %841 = vmatprep.subr.mxu0 0.0
        %842 = vmatpush1.msra.mxu0 0.0
        %843 = vmatprep.subr.mxu0 0.0
        %844 = vmatpush1.msra.mxu0 0.0
        %845 = vmatprep.subr.mxu0 0.0
        %846 = vmatpush1.msra.mxu0 0.0
        %847 = vmatprep.subr.mxu0 0.0
        %848 = vmatpush1.msra.mxu0 0.0
        %849 = vmatprep.subr.mxu0 0.0
        %850 = vmatpush1.msra.mxu0 0.0
        %851 = vmatprep.subr.mxu0 0.0
        %852 = vmatpush1.msra.mxu0 0.0
        %853 = vmatprep.mubr.f32.mxu0 0.0
        %854 = vmatmul.mubr.f32.gmra.mrb[0].mxu0 %v778
        %v855 = vpop.f32.mrb[0].mxu0
        %v856 = vadd.f32 %v502, %v855
        %v857 = vpop.f32.mrb[0].mxu0
        %v858 = vadd.f32 %v502, %v857
        %859 = vmatprep.mubr.f32.mxu0 0.0
        %860 = vmatmul.mubr.f32.gmra.mrb[0].mxu0 %v781
        %v861 = vpop.f32.mrb[0].mxu0
        %v862 = vadd.f32 %v507, %v861
        %v863 = vpop.f32.mrb[0].mxu0
        %v864 = vadd.f32 %v507, %v863
        %865 = vmatprep.mubr.f32.mxu0 0.0
        %866 = vmatmul.mubr.f32.gmra.mrb[0].mxu0 %v784
        %v867 = vpop.f32.mrb[0].mxu0
        %v868 = vadd.f32 %v512, %v867
        %v869 = vpop.f32.mrb[0].mxu0
        %v870 = vadd.f32 %v512, %v869
        %871 = vmatprep.mubr.f32.mxu0 0.0
        %872 = vmatmul.mubr.f32.gmra.mrb[0].mxu0 %v787
        %v873 = vpop.f32.mrb[0].mxu0
        %v874 = vadd.f32 %v517, %v873
        %v875 = vpop.f32.mrb[0].mxu0
        %v876 = vadd.f32 %v517, %v875
        %877 = vdwg.mxu0
        %878 = vmatprep.subr.mxu0 %v763
        %879 = vmatpush1.msra.mxu0 %v762
        %880 = vmatprep.subr.mxu0 %v767
        %881 = vmatpush1.msra.mxu0 %v766
        %882 = vmatprep.subr.mxu0 %v771
        %883 = vmatpush1.msra.mxu0 %v770
        %884 = vmatprep.subr.mxu0 %v775
        %885 = vmatpush1.msra.mxu0 %v774
        %886 = vmatprep.subr.mxu0 0.0
        %887 = vmatpush1.msra.mxu0 0.0
        %888 = vmatprep.subr.mxu0 0.0
        %889 = vmatpush1.msra.mxu0 0.0
        %890 = vmatprep.subr.mxu0 0.0
        %891 = vmatpush1.msra.mxu0 0.0
        %892 = vmatprep.subr.mxu0 0.0
        %893 = vmatpush1.msra.mxu0 0.0
        %894 = vmatprep.subr.mxu0 0.0
        %895 = vmatpush1.msra.mxu0 0.0
        %896 = vmatprep.subr.mxu0 0.0
        %897 = vmatpush1.msra.mxu0 0.0
        %898 = vmatprep.subr.mxu0 0.0
        %899 = vmatpush1.msra.mxu0 0.0
        %900 = vmatprep.subr.mxu0 0.0
        %901 = vmatpush1.msra.mxu0 0.0
        %902 = vmatprep.subr.mxu0 0.0
        %903 = vmatpush1.msra.mxu0 0.0
        %904 = vmatprep.subr.mxu0 0.0
        %905 = vmatpush1.msra.mxu0 0.0
        %906 = vmatprep.subr.mxu0 0.0
        %907 = vmatpush1.msra.mxu0 0.0
        %908 = vmatprep.subr.mxu0 0.0
        %909 = vmatpush1.msra.mxu0 0.0
        %910 = vmatprep.subr.mxu0 0.0
        %911 = vmatpush1.msra.mxu0 0.0
        %912 = vmatprep.subr.mxu0 0.0
        %913 = vmatpush1.msra.mxu0 0.0
        %914 = vmatprep.subr.mxu0 0.0
        %915 = vmatpush1.msra.mxu0 0.0
        %916 = vmatprep.subr.mxu0 0.0
        %917 = vmatpush1.msra.mxu0 0.0
        %918 = vmatprep.subr.mxu0 0.0
        %919 = vmatpush1.msra.mxu0 0.0
        %920 = vmatprep.subr.mxu0 0.0
        %921 = vmatpush1.msra.mxu0 0.0
        %922 = vmatprep.subr.mxu0 0.0
        %923 = vmatpush1.msra.mxu0 0.0
        %924 = vmatprep.subr.mxu0 0.0
        %925 = vmatpush1.msra.mxu0 0.0
        %926 = vmatprep.subr.mxu0 0.0
        %927 = vmatpush1.msra.mxu0 0.0
        %928 = vmatprep.subr.mxu0 0.0
        %929 = vmatpush1.msra.mxu0 0.0
        %930 = vmatprep.subr.mxu0 0.0
        %931 = vmatpush1.msra.mxu0 0.0
        %932 = vmatprep.subr.mxu0 0.0
        %933 = vmatpush1.msra.mxu0 0.0
        %934 = vmatprep.subr.mxu0 0.0
        %935 = vmatpush1.msra.mxu0 0.0
        %936 = vmatprep.subr.mxu0 0.0
        %937 = vmatpush1.msra.mxu0 0.0
        %938 = vmatprep.subr.mxu0 0.0
        %939 = vmatpush1.msra.mxu0 0.0
        %940 = vmatprep.subr.mxu0 0.0
        %941 = vmatpush1.msra.mxu0 0.0
        %942 = vmatprep.mubr.f32.mxu0 0.0
        %943 = vmatmul.mubr.f32.gmra.mrb[0].mxu0 %v778
        %v944 = vpop.f32.mrb[0].mxu0
        %v945 = vadd.f32 %v502, %v944
        %v946 = vpop.f32.mrb[0].mxu0
        %v947 = vadd.f32 %v502, %v946
        %948 = vmatprep.mubr.f32.mxu0 0.0
        %949 = vmatmul.mubr.f32.gmra.mrb[0].mxu0 %v781
        %v950 = vpop.f32.mrb[0].mxu0
        %v951 = vadd.f32 %v507, %v950
        %v952 = vpop.f32.mrb[0].mxu0
        %v953 = vadd.f32 %v507, %v952
        %954 = vmatprep.mubr.f32.mxu0 0.0
        %955 = vmatmul.mubr.f32.gmra.mrb[0].mxu0 %v784
        %v956 = vpop.f32.mrb[0].mxu0
        %v957 = vadd.f32 %v512, %v956
        %v958 = vpop.f32.mrb[0].mxu0
        %v959 = vadd.f32 %v512, %v958
        %960 = vmatprep.mubr.f32.mxu0 0.0
        %961 = vmatmul.mubr.f32.gmra.mrb[0].mxu0 %v787
        %v962 = vpop.f32.mrb[0].mxu0
        %v963 = vadd.f32 %v517, %v962
        %v964 = vpop.f32.mrb[0].mxu0
        %v965 = vadd.f32 %v517, %v964
        %966 = vdwg.mxu0
        %vm967 = vcmp.ge.f32.partialorder %v856, 0.0
        %vm968 = vcmp.ge.f32.partialorder %v858, 0.0
        %vm969 = vcmp.ge.f32.partialorder %v945, 0.0
        %vm970 = vcmp.ge.f32.partialorder %v947, 0.0
        %vm971 = vcmp.ge.f32.partialorder %v862, 0.0
        %vm972 = vcmp.ge.f32.partialorder %v864, 0.0
        %vm973 = vcmp.ge.f32.partialorder %v951, 0.0
        %vm974 = vcmp.ge.f32.partialorder %v953, 0.0
        %vm975 = vcmp.ge.f32.partialorder %v868, 0.0
        %vm976 = vcmp.ge.f32.partialorder %v870, 0.0
        %vm977 = vcmp.ge.f32.partialorder %v957, 0.0
        %vm978 = vcmp.ge.f32.partialorder %v959, 0.0
        %vm979 = vcmp.ge.f32.partialorder %v874, 0.0
        %vm980 = vcmp.ge.f32.partialorder %v876, 0.0
        %vm981 = vcmp.ge.f32.partialorder %v963, 0.0
        %vm982 = vcmp.ge.f32.partialorder %v965, 0.0
        %v983 = vmul.f32 %v856, 0.01
        %v984 = vmul.f32 %v858, 0.01
        %v985 = vmul.f32 %v945, 0.01
        %v986 = vmul.f32 %v947, 0.01
        %v987 = vmul.f32 %v862, 0.01
        %v988 = vmul.f32 %v864, 0.01
        %v989 = vmul.f32 %v951, 0.01
        %v990 = vmul.f32 %v953, 0.01
        %v991 = vmul.f32 %v868, 0.01
        %v992 = vmul.f32 %v870, 0.01
        %v993 = vmul.f32 %v957, 0.01
        %v994 = vmul.f32 %v959, 0.01
        %v995 = vmul.f32 %v874, 0.01
        %v996 = vmul.f32 %v876, 0.01
        %v997 = vmul.f32 %v963, 0.01
        %v998 = vmul.f32 %v965, 0.01
        %v999 = vsel %vm967, %v856, %v983
        %v1000 = vsel %vm968, %v858, %v984
        %v1001 = vsel %vm969, %v945, %v985
        %v1002 = vsel %vm970, %v947, %v986
        %v1003 = vsel %vm971, %v862, %v987
        %v1004 = vsel %vm972, %v864, %v988
        %v1005 = vsel %vm973, %v951, %v989
        %v1006 = vsel %vm974, %v953, %v990
        %v1007 = vsel %vm975, %v868, %v991
        %v1008 = vsel %vm976, %v870, %v992
        %v1009 = vsel %vm977, %v957, %v993
        %v1010 = vsel %vm978, %v959, %v994
        %v1011 = vsel %vm979, %v874, %v995
        %v1012 = vsel %vm980, %v876, %v996
        %v1013 = vsel %vm981, %v963, %v997
        %v1014 = vsel %vm982, %v965, %v998
        %v1015 = vmax.f32 %v999, %v1000
        %v1016 = vmax.f32 %v1003, %v1004
        %v1017 = vmax.f32 %v1007, %v1008
        %v1018 = vmax.f32 %v1011, %v1012
        %v1019 = vadd.f32 %v999, %v1000
        %v1020 = vadd.f32 %v1003, %v1004
        %v1021 = vadd.f32 %v1007, %v1008
        %v1022 = vadd.f32 %v1011, %v1012
        %v1023 = vmax.f32 %v1015, %v1001
        %v1024 = vmax.f32 %v1016, %v1005
        %v1025 = vmax.f32 %v1017, %v1009
        %v1026 = vmax.f32 %v1018, %v1013
        %v1027 = vadd.f32 %v1019, %v1001
        %v1028 = vadd.f32 %v1020, %v1005
        %v1029 = vadd.f32 %v1021, %v1009
        %v1030 = vadd.f32 %v1022, %v1013
        %v1031 = vmax.f32 %v1023, %v1002
        %v1032 = vmax.f32 %v1024, %v1006
        %v1033 = vmax.f32 %v1025, %v1010
        %v1034 = vmax.f32 %v1026, %v1014
        %v1035 = vadd.f32 %v1027, %v1002
        %v1036 = vadd.f32 %v1028, %v1006
        %v1037 = vadd.f32 %v1029, %v1010
        %v1038 = vadd.f32 %v1030, %v1014
        %s1039 = scalar_lea.vmem %s319, 32 [#allocation2]
        %v1040 = vld [vmem:[%s1039] sm:$0x3f]
        %s1041 = scalar_lea.vmem %s319, 40 [#allocation2]
        %v1042 = vld [vmem:[%s1041] sm:$0x3f]
        %s1043 = scalar_lea.vmem %s319, 48 [#allocation2]
        %v1044 = vld [vmem:[%s1043] sm:$0x3f]
        %s1045 = scalar_lea.vmem %s319, 56 [#allocation2]
        %v1046 = vld [vmem:[%s1045] sm:$0x3f]
        %v1048 = vsel %vm410, %v1040, 0
        %v1051 = vsel %vm410, %v1042, 0
        %v1054 = vsel %vm410, %v1044, 0
        %v1057 = vsel %vm410, %v1046, 0
        %1059 = vmatprep.subr.mxu0 %v1051
        %1060 = vmatpush1.msra.mxu0 %v1048
        %1061 = vmatprep.subr.mxu0 0.0
        %1062 = vmatpush1.msra.mxu0 0.0
        %1063 = vmatprep.subr.mxu0 0.0
        %1064 = vmatpush1.msra.mxu0 0.0
        %1065 = vmatprep.subr.mxu0 0.0
        %1066 = vmatpush1.msra.mxu0 0.0
        %1067 = vmatprep.subr.mxu0 0.0
        %1068 = vmatpush1.msra.mxu0 0.0
        %1069 = vmatprep.subr.mxu0 0.0
        %1070 = vmatpush1.msra.mxu0 0.0
        %1071 = vmatprep.subr.mxu0 0.0
        %1072 = vmatpush1.msra.mxu0 0.0
        %1073 = vmatprep.subr.mxu0 0.0
        %1074 = vmatpush1.msra.mxu0 0.0
        %1075 = vmatprep.subr.mxu0 0.0
        %1076 = vmatpush1.msra.mxu0 0.0
        %1077 = vmatprep.subr.mxu0 0.0
        %1078 = vmatpush1.msra.mxu0 0.0
        %1079 = vmatprep.subr.mxu0 0.0
        %1080 = vmatpush1.msra.mxu0 0.0
        %1081 = vmatprep.subr.mxu0 0.0
        %1082 = vmatpush1.msra.mxu0 0.0
        %1083 = vmatprep.subr.mxu0 0.0
        %1084 = vmatpush1.msra.mxu0 0.0
        %1085 = vmatprep.subr.mxu0 0.0
        %1086 = vmatpush1.msra.mxu0 0.0
        %1087 = vmatprep.subr.mxu0 0.0
        %1088 = vmatpush1.msra.mxu0 0.0
        %1089 = vmatprep.subr.mxu0 0.0
        %1090 = vmatpush1.msra.mxu0 0.0
        %1091 = vmatprep.subr.mxu0 0.0
        %1092 = vmatpush1.msra.mxu0 0.0
        %1093 = vmatprep.subr.mxu0 0.0
        %1094 = vmatpush1.msra.mxu0 0.0
        %1095 = vmatprep.subr.mxu0 0.0
        %1096 = vmatpush1.msra.mxu0 0.0
        %1097 = vmatprep.subr.mxu0 0.0
        %1098 = vmatpush1.msra.mxu0 0.0
        %1099 = vmatprep.subr.mxu0 0.0
        %1100 = vmatpush1.msra.mxu0 0.0
        %1101 = vmatprep.subr.mxu0 0.0
        %1102 = vmatpush1.msra.mxu0 0.0
        %1103 = vmatprep.subr.mxu0 0.0
        %1104 = vmatpush1.msra.mxu0 0.0
        %1105 = vmatprep.subr.mxu0 0.0
        %1106 = vmatpush1.msra.mxu0 0.0
        %1107 = vmatprep.subr.mxu0 0.0
        %1108 = vmatpush1.msra.mxu0 0.0
        %1109 = vmatprep.subr.mxu0 0.0
        %1110 = vmatpush1.msra.mxu0 0.0
        %1111 = vmatprep.subr.mxu0 0.0
        %1112 = vmatpush1.msra.mxu0 0.0
        %1113 = vmatprep.subr.mxu0 0.0
        %1114 = vmatpush1.msra.mxu0 0.0
        %1115 = vmatprep.subr.mxu0 0.0
        %1116 = vmatpush1.msra.mxu0 0.0
        %1117 = vmatprep.subr.mxu0 0.0
        %1118 = vmatpush1.msra.mxu0 0.0
        %1119 = vmatprep.subr.mxu0 0.0
        %1120 = vmatpush1.msra.mxu0 0.0
        %1121 = vmatprep.subr.mxu0 0.0
        %1122 = vmatpush1.msra.mxu0 0.0
        %1123 = vmatprep.mubr.f32.mxu0 0.0
        %1124 = vmatmul.mubr.f32.gmra.mrb[0].mxu0 %v527
        %v1125 = vpop.f32.mrb[0].mxu0
        %v1126 = vadd.f32 %v481, %v1125
        %v1127 = vpop.f32.mrb[0].mxu0
        %v1128 = vadd.f32 %v481, %v1127
        %1129 = vmatprep.mubr.f32.mxu0 0.0
        %1130 = vmatmul.mubr.f32.gmra.mrb[0].mxu0 %v530
        %v1131 = vpop.f32.mrb[0].mxu0
        %v1132 = vadd.f32 %v486, %v1131
        %v1133 = vpop.f32.mrb[0].mxu0
        %v1134 = vadd.f32 %v486, %v1133
        %1135 = vmatprep.mubr.f32.mxu0 0.0
        %1136 = vmatmul.mubr.f32.gmra.mrb[0].mxu0 %v533
        %v1137 = vpop.f32.mrb[0].mxu0
        %v1138 = vadd.f32 %v491, %v1137
        %v1139 = vpop.f32.mrb[0].mxu0
        %v1140 = vadd.f32 %v491, %v1139
        %1141 = vmatprep.mubr.f32.mxu0 0.0
        %1142 = vmatmul.mubr.f32.gmra.mrb[0].mxu0 %v536
        %v1143 = vpop.f32.mrb[0].mxu0
        %v1144 = vadd.f32 %v496, %v1143
        %v1145 = vpop.f32.mrb[0].mxu0
        %v1146 = vadd.f32 %v496, %v1145
        %1147 = vdwg.mxu0
        %1148 = vmatprep.subr.mxu0 %v1057
        %1149 = vmatpush1.msra.mxu0 %v1054
        %1150 = vmatprep.subr.mxu0 0.0
        %1151 = vmatpush1.msra.mxu0 0.0
        %1152 = vmatprep.subr.mxu0 0.0
        %1153 = vmatpush1.msra.mxu0 0.0
        %1154 = vmatprep.subr.mxu0 0.0
        %1155 = vmatpush1.msra.mxu0 0.0
        %1156 = vmatprep.subr.mxu0 0.0
        %1157 = vmatpush1.msra.mxu0 0.0
        %1158 = vmatprep.subr.mxu0 0.0
        %1159 = vmatpush1.msra.mxu0 0.0
        %1160 = vmatprep.subr.mxu0 0.0
        %1161 = vmatpush1.msra.mxu0 0.0
        %1162 = vmatprep.subr.mxu0 0.0
        %1163 = vmatpush1.msra.mxu0 0.0
        %1164 = vmatprep.subr.mxu0 0.0
        %1165 = vmatpush1.msra.mxu0 0.0
        %1166 = vmatprep.subr.mxu0 0.0
        %1167 = vmatpush1.msra.mxu0 0.0
        %1168 = vmatprep.subr.mxu0 0.0
        %1169 = vmatpush1.msra.mxu0 0.0
        %1170 = vmatprep.subr.mxu0 0.0
        %1171 = vmatpush1.msra.mxu0 0.0
        %1172 = vmatprep.subr.mxu0 0.0
        %1173 = vmatpush1.msra.mxu0 0.0
        %1174 = vmatprep.subr.mxu0 0.0
        %1175 = vmatpush1.msra.mxu0 0.0
        %1176 = vmatprep.subr.mxu0 0.0
        %1177 = vmatpush1.msra.mxu0 0.0
        %1178 = vmatprep.subr.mxu0 0.0
        %1179 = vmatpush1.msra.mxu0 0.0
        %1180 = vmatprep.subr.mxu0 0.0
        %1181 = vmatpush1.msra.mxu0 0.0
        %1182 = vmatprep.subr.mxu0 0.0
        %1183 = vmatpush1.msra.mxu0 0.0
        %1184 = vmatprep.subr.mxu0 0.0
        %1185 = vmatpush1.msra.mxu0 0.0
        %1186 = vmatprep.subr.mxu0 0.0
        %1187 = vmatpush1.msra.mxu0 0.0
        %1188 = vmatprep.subr.mxu0 0.0
        %1189 = vmatpush1.msra.mxu0 0.0
        %1190 = vmatprep.subr.mxu0 0.0
        %1191 = vmatpush1.msra.mxu0 0.0
        %1192 = vmatprep.subr.mxu0 0.0
        %1193 = vmatpush1.msra.mxu0 0.0
        %1194 = vmatprep.subr.mxu0 0.0
        %1195 = vmatpush1.msra.mxu0 0.0
        %1196 = vmatprep.subr.mxu0 0.0
        %1197 = vmatpush1.msra.mxu0 0.0
        %1198 = vmatprep.subr.mxu0 0.0
        %1199 = vmatpush1.msra.mxu0 0.0
        %1200 = vmatprep.subr.mxu0 0.0
        %1201 = vmatpush1.msra.mxu0 0.0
        %1202 = vmatprep.subr.mxu0 0.0
        %1203 = vmatpush1.msra.mxu0 0.0
        %1204 = vmatprep.subr.mxu0 0.0
        %1205 = vmatpush1.msra.mxu0 0.0
        %1206 = vmatprep.subr.mxu0 0.0
        %1207 = vmatpush1.msra.mxu0 0.0
        %1208 = vmatprep.subr.mxu0 0.0
        %1209 = vmatpush1.msra.mxu0 0.0
        %1210 = vmatprep.subr.mxu0 0.0
        %1211 = vmatpush1.msra.mxu0 0.0
        %1212 = vmatprep.mubr.f32.mxu0 0.0
        %1213 = vmatmul.mubr.f32.gmra.mrb[0].mxu0 %v527
        %v1214 = vpop.f32.mrb[0].mxu0
        %v1215 = vadd.f32 %v481, %v1214
        %v1216 = vpop.f32.mrb[0].mxu0
        %v1217 = vadd.f32 %v481, %v1216
        %1218 = vmatprep.mubr.f32.mxu0 0.0
        %1219 = vmatmul.mubr.f32.gmra.mrb[0].mxu0 %v530
        %v1220 = vpop.f32.mrb[0].mxu0
        %v1221 = vadd.f32 %v486, %v1220
        %v1222 = vpop.f32.mrb[0].mxu0
        %v1223 = vadd.f32 %v486, %v1222
        %1224 = vmatprep.mubr.f32.mxu0 0.0
        %1225 = vmatmul.mubr.f32.gmra.mrb[0].mxu0 %v533
        %v1226 = vpop.f32.mrb[0].mxu0
        %v1227 = vadd.f32 %v491, %v1226
        %v1228 = vpop.f32.mrb[0].mxu0
        %v1229 = vadd.f32 %v491, %v1228
        %1230 = vmatprep.mubr.f32.mxu0 0.0
        %1231 = vmatmul.mubr.f32.gmra.mrb[0].mxu0 %v536
        %v1232 = vpop.f32.mrb[0].mxu0
        %v1233 = vadd.f32 %v496, %v1232
        %v1234 = vpop.f32.mrb[0].mxu0
        %v1235 = vadd.f32 %v496, %v1234
        %1236 = vdwg.mxu0
        %vm1237 = vcmp.ge.f32.partialorder %v1126, 0.0
        %vm1238 = vcmp.ge.f32.partialorder %v1128, 0.0
        %vm1239 = vcmp.ge.f32.partialorder %v1215, 0.0
        %vm1240 = vcmp.ge.f32.partialorder %v1217, 0.0
        %vm1241 = vcmp.ge.f32.partialorder %v1132, 0.0
        %vm1242 = vcmp.ge.f32.partialorder %v1134, 0.0
        %vm1243 = vcmp.ge.f32.partialorder %v1221, 0.0
        %vm1244 = vcmp.ge.f32.partialorder %v1223, 0.0
        %vm1245 = vcmp.ge.f32.partialorder %v1138, 0.0
        %vm1246 = vcmp.ge.f32.partialorder %v1140, 0.0
        %vm1247 = vcmp.ge.f32.partialorder %v1227, 0.0
        %vm1248 = vcmp.ge.f32.partialorder %v1229, 0.0
        %vm1249 = vcmp.ge.f32.partialorder %v1144, 0.0
        %vm1250 = vcmp.ge.f32.partialorder %v1146, 0.0
        %vm1251 = vcmp.ge.f32.partialorder %v1233, 0.0
        %vm1252 = vcmp.ge.f32.partialorder %v1235, 0.0
        %v1253 = vmul.f32 %v1126, 0.01
        %v1254 = vmul.f32 %v1128, 0.01
        %v1255 = vmul.f32 %v1215, 0.01
        %v1256 = vmul.f32 %v1217, 0.01
        %v1257 = vmul.f32 %v1132, 0.01
        %v1258 = vmul.f32 %v1134, 0.01
        %v1259 = vmul.f32 %v1221, 0.01
        %v1260 = vmul.f32 %v1223, 0.01
        %v1261 = vmul.f32 %v1138, 0.01
        %v1262 = vmul.f32 %v1140, 0.01
        %v1263 = vmul.f32 %v1227, 0.01
        %v1264 = vmul.f32 %v1229, 0.01
        %v1265 = vmul.f32 %v1144, 0.01
        %v1266 = vmul.f32 %v1146, 0.01
        %v1267 = vmul.f32 %v1233, 0.01
        %v1268 = vmul.f32 %v1235, 0.01
        %v1269 = vsel %vm1237, %v1126, %v1253
        %v1270 = vsel %vm1238, %v1128, %v1254
        %v1271 = vsel %vm1239, %v1215, %v1255
        %v1272 = vsel %vm1240, %v1217, %v1256
        %v1273 = vsel %vm1241, %v1132, %v1257
        %v1274 = vsel %vm1242, %v1134, %v1258
        %v1275 = vsel %vm1243, %v1221, %v1259
        %v1276 = vsel %vm1244, %v1223, %v1260
        %v1277 = vsel %vm1245, %v1138, %v1261
        %v1278 = vsel %vm1246, %v1140, %v1262
        %v1279 = vsel %vm1247, %v1227, %v1263
        %v1280 = vsel %vm1248, %v1229, %v1264
        %v1281 = vsel %vm1249, %v1144, %v1265
        %v1282 = vsel %vm1250, %v1146, %v1266
        %v1283 = vsel %vm1251, %v1233, %v1267
        %v1284 = vsel %vm1252, %v1235, %v1268
        %1285 = vmatprep.subr.mxu0 %v1270
        %1286 = vmatpush1.msra.mxu0 %v1269
        %1287 = vmatprep.subr.mxu0 %v1274
        %1288 = vmatpush1.msra.mxu0 %v1273
        %1289 = vmatprep.subr.mxu0 %v1278
        %1290 = vmatpush1.msra.mxu0 %v1277
        %1291 = vmatprep.subr.mxu0 %v1282
        %1292 = vmatpush1.msra.mxu0 %v1281
        %1293 = vmatprep.subr.mxu0 0.0
        %1294 = vmatpush1.msra.mxu0 0.0
        %1295 = vmatprep.subr.mxu0 0.0
        %1296 = vmatpush1.msra.mxu0 0.0
        %1297 = vmatprep.subr.mxu0 0.0
        %1298 = vmatpush1.msra.mxu0 0.0
        %1299 = vmatprep.subr.mxu0 0.0
        %1300 = vmatpush1.msra.mxu0 0.0
        %1301 = vmatprep.subr.mxu0 0.0
        %1302 = vmatpush1.msra.mxu0 0.0
        %1303 = vmatprep.subr.mxu0 0.0
        %1304 = vmatpush1.msra.mxu0 0.0
        %1305 = vmatprep.subr.mxu0 0.0
        %1306 = vmatpush1.msra.mxu0 0.0
        %1307 = vmatprep.subr.mxu0 0.0
        %1308 = vmatpush1.msra.mxu0 0.0
        %1309 = vmatprep.subr.mxu0 0.0
        %1310 = vmatpush1.msra.mxu0 0.0
        %1311 = vmatprep.subr.mxu0 0.0
        %1312 = vmatpush1.msra.mxu0 0.0
        %1313 = vmatprep.subr.mxu0 0.0
        %1314 = vmatpush1.msra.mxu0 0.0
        %1315 = vmatprep.subr.mxu0 0.0
        %1316 = vmatpush1.msra.mxu0 0.0
        %1317 = vmatprep.subr.mxu0 0.0
        %1318 = vmatpush1.msra.mxu0 0.0
        %1319 = vmatprep.subr.mxu0 0.0
        %1320 = vmatpush1.msra.mxu0 0.0
        %1321 = vmatprep.subr.mxu0 0.0
        %1322 = vmatpush1.msra.mxu0 0.0
        %1323 = vmatprep.subr.mxu0 0.0
        %1324 = vmatpush1.msra.mxu0 0.0
        %1325 = vmatprep.subr.mxu0 0.0
        %1326 = vmatpush1.msra.mxu0 0.0
        %1327 = vmatprep.subr.mxu0 0.0
        %1328 = vmatpush1.msra.mxu0 0.0
        %1329 = vmatprep.subr.mxu0 0.0
        %1330 = vmatpush1.msra.mxu0 0.0
        %1331 = vmatprep.subr.mxu0 0.0
        %1332 = vmatpush1.msra.mxu0 0.0
        %1333 = vmatprep.subr.mxu0 0.0
        %1334 = vmatpush1.msra.mxu0 0.0
        %1335 = vmatprep.subr.mxu0 0.0
        %1336 = vmatpush1.msra.mxu0 0.0
        %1337 = vmatprep.subr.mxu0 0.0
        %1338 = vmatpush1.msra.mxu0 0.0
        %1339 = vmatprep.subr.mxu0 0.0
        %1340 = vmatpush1.msra.mxu0 0.0
        %1341 = vmatprep.subr.mxu0 0.0
        %1342 = vmatpush1.msra.mxu0 0.0
        %1343 = vmatprep.subr.mxu0 0.0
        %1344 = vmatpush1.msra.mxu0 0.0
        %1345 = vmatprep.subr.mxu0 0.0
        %1346 = vmatpush1.msra.mxu0 0.0
        %1347 = vmatprep.subr.mxu0 0.0
        %1348 = vmatpush1.msra.mxu0 0.0
        %1349 = vmatprep.mubr.f32.mxu0 0.0
        %1350 = vmatmul.mubr.f32.gmra.mrb[0].mxu0 %v778
        %v1351 = vpop.f32.mrb[0].mxu0
        %v1352 = vadd.f32 %v502, %v1351
        %v1353 = vpop.f32.mrb[0].mxu0
        %v1354 = vadd.f32 %v502, %v1353
        %1355 = vmatprep.mubr.f32.mxu0 0.0
        %1356 = vmatmul.mubr.f32.gmra.mrb[0].mxu0 %v781
        %v1357 = vpop.f32.mrb[0].mxu0
        %v1358 = vadd.f32 %v507, %v1357
        %v1359 = vpop.f32.mrb[0].mxu0
        %v1360 = vadd.f32 %v507, %v1359
        %1361 = vmatprep.mubr.f32.mxu0 0.0
        %1362 = vmatmul.mubr.f32.gmra.mrb[0].mxu0 %v784
        %v1363 = vpop.f32.mrb[0].mxu0
        %v1364 = vadd.f32 %v512, %v1363
        %v1365 = vpop.f32.mrb[0].mxu0
        %v1366 = vadd.f32 %v512, %v1365
        %1367 = vmatprep.mubr.f32.mxu0 0.0
        %1368 = vmatmul.mubr.f32.gmra.mrb[0].mxu0 %v787
        %v1369 = vpop.f32.mrb[0].mxu0
        %v1370 = vadd.f32 %v517, %v1369
        %v1371 = vpop.f32.mrb[0].mxu0
        %v1372 = vadd.f32 %v517, %v1371
        %1373 = vdwg.mxu0
        %1374 = vmatprep.subr.mxu0 %v1272
        %1375 = vmatpush1.msra.mxu0 %v1271
        %1376 = vmatprep.subr.mxu0 %v1276
        %1377 = vmatpush1.msra.mxu0 %v1275
        %1378 = vmatprep.subr.mxu0 %v1280
        %1379 = vmatpush1.msra.mxu0 %v1279
        %1380 = vmatprep.subr.mxu0 %v1284
        %1381 = vmatpush1.msra.mxu0 %v1283
        %1382 = vmatprep.subr.mxu0 0.0
        %1383 = vmatpush1.msra.mxu0 0.0
        %1384 = vmatprep.subr.mxu0 0.0
        %1385 = vmatpush1.msra.mxu0 0.0
        %1386 = vmatprep.subr.mxu0 0.0
        %1387 = vmatpush1.msra.mxu0 0.0
        %1388 = vmatprep.subr.mxu0 0.0
        %1389 = vmatpush1.msra.mxu0 0.0
        %1390 = vmatprep.subr.mxu0 0.0
        %1391 = vmatpush1.msra.mxu0 0.0
        %1392 = vmatprep.subr.mxu0 0.0
        %1393 = vmatpush1.msra.mxu0 0.0
        %1394 = vmatprep.subr.mxu0 0.0
        %1395 = vmatpush1.msra.mxu0 0.0
        %1396 = vmatprep.subr.mxu0 0.0
        %1397 = vmatpush1.msra.mxu0 0.0
        %1398 = vmatprep.subr.mxu0 0.0
        %1399 = vmatpush1.msra.mxu0 0.0
        %1400 = vmatprep.subr.mxu0 0.0
        %1401 = vmatpush1.msra.mxu0 0.0
        %1402 = vmatprep.subr.mxu0 0.0
        %1403 = vmatpush1.msra.mxu0 0.0
        %1404 = vmatprep.subr.mxu0 0.0
        %1405 = vmatpush1.msra.mxu0 0.0
        %1406 = vmatprep.subr.mxu0 0.0
        %1407 = vmatpush1.msra.mxu0 0.0
        %1408 = vmatprep.subr.mxu0 0.0
        %1409 = vmatpush1.msra.mxu0 0.0
        %1410 = vmatprep.subr.mxu0 0.0
        %1411 = vmatpush1.msra.mxu0 0.0
        %1412 = vmatprep.subr.mxu0 0.0
        %1413 = vmatpush1.msra.mxu0 0.0
        %1414 = vmatprep.subr.mxu0 0.0
        %1415 = vmatpush1.msra.mxu0 0.0
        %1416 = vmatprep.subr.mxu0 0.0
        %1417 = vmatpush1.msra.mxu0 0.0
        %1418 = vmatprep.subr.mxu0 0.0
        %1419 = vmatpush1.msra.mxu0 0.0
        %1420 = vmatprep.subr.mxu0 0.0
        %1421 = vmatpush1.msra.mxu0 0.0
        %1422 = vmatprep.subr.mxu0 0.0
        %1423 = vmatpush1.msra.mxu0 0.0
        %1424 = vmatprep.subr.mxu0 0.0
        %1425 = vmatpush1.msra.mxu0 0.0
        %1426 = vmatprep.subr.mxu0 0.0
        %1427 = vmatpush1.msra.mxu0 0.0
        %1428 = vmatprep.subr.mxu0 0.0
        %1429 = vmatpush1.msra.mxu0 0.0
        %1430 = vmatprep.subr.mxu0 0.0
        %1431 = vmatpush1.msra.mxu0 0.0
        %1432 = vmatprep.subr.mxu0 0.0
        %1433 = vmatpush1.msra.mxu0 0.0
        %1434 = vmatprep.subr.mxu0 0.0
        %1435 = vmatpush1.msra.mxu0 0.0
        %1436 = vmatprep.subr.mxu0 0.0
        %1437 = vmatpush1.msra.mxu0 0.0
        %1438 = vmatprep.mubr.f32.mxu0 0.0
        %1439 = vmatmul.mubr.f32.gmra.mrb[0].mxu0 %v778
        %v1440 = vpop.f32.mrb[0].mxu0
        %v1441 = vadd.f32 %v502, %v1440
        %v1442 = vpop.f32.mrb[0].mxu0
        %v1443 = vadd.f32 %v502, %v1442
        %1444 = vmatprep.mubr.f32.mxu0 0.0
        %1445 = vmatmul.mubr.f32.gmra.mrb[0].mxu0 %v781
        %v1446 = vpop.f32.mrb[0].mxu0
        %v1447 = vadd.f32 %v507, %v1446
        %v1448 = vpop.f32.mrb[0].mxu0
        %v1449 = vadd.f32 %v507, %v1448
        %1450 = vmatprep.mubr.f32.mxu0 0.0
        %1451 = vmatmul.mubr.f32.gmra.mrb[0].mxu0 %v784
        %v1452 = vpop.f32.mrb[0].mxu0
        %v1453 = vadd.f32 %v512, %v1452
        %v1454 = vpop.f32.mrb[0].mxu0
        %v1455 = vadd.f32 %v512, %v1454
        %1456 = vmatprep.mubr.f32.mxu0 0.0
        %1457 = vmatmul.mubr.f32.gmra.mrb[0].mxu0 %v787
        %v1458 = vpop.f32.mrb[0].mxu0
        %v1459 = vadd.f32 %v517, %v1458
        %v1460 = vpop.f32.mrb[0].mxu0
        %v1461 = vadd.f32 %v517, %v1460
        %1462 = vdwg.mxu0
        %vm1463 = vcmp.ge.f32.partialorder %v1352, 0.0
        %vm1464 = vcmp.ge.f32.partialorder %v1354, 0.0
        %vm1465 = vcmp.ge.f32.partialorder %v1441, 0.0
        %vm1466 = vcmp.ge.f32.partialorder %v1443, 0.0
        %vm1467 = vcmp.ge.f32.partialorder %v1358, 0.0
        %vm1468 = vcmp.ge.f32.partialorder %v1360, 0.0
        %vm1469 = vcmp.ge.f32.partialorder %v1447, 0.0
        %vm1470 = vcmp.ge.f32.partialorder %v1449, 0.0
        %vm1471 = vcmp.ge.f32.partialorder %v1364, 0.0
        %vm1472 = vcmp.ge.f32.partialorder %v1366, 0.0
        %vm1473 = vcmp.ge.f32.partialorder %v1453, 0.0
        %vm1474 = vcmp.ge.f32.partialorder %v1455, 0.0
        %vm1475 = vcmp.ge.f32.partialorder %v1370, 0.0
        %vm1476 = vcmp.ge.f32.partialorder %v1372, 0.0
        %vm1477 = vcmp.ge.f32.partialorder %v1459, 0.0
        %vm1478 = vcmp.ge.f32.partialorder %v1461, 0.0
        %v1479 = vmul.f32 %v1352, 0.01
        %v1480 = vmul.f32 %v1354, 0.01
        %v1481 = vmul.f32 %v1441, 0.01
        %v1482 = vmul.f32 %v1443, 0.01
        %v1483 = vmul.f32 %v1358, 0.01
        %v1484 = vmul.f32 %v1360, 0.01
        %v1485 = vmul.f32 %v1447, 0.01
        %v1486 = vmul.f32 %v1449, 0.01
        %v1487 = vmul.f32 %v1364, 0.01
        %v1488 = vmul.f32 %v1366, 0.01
        %v1489 = vmul.f32 %v1453, 0.01
        %v1490 = vmul.f32 %v1455, 0.01
        %v1491 = vmul.f32 %v1370, 0.01
        %v1492 = vmul.f32 %v1372, 0.01
        %v1493 = vmul.f32 %v1459, 0.01
        %v1494 = vmul.f32 %v1461, 0.01
        %v1495 = vsel %vm1463, %v1352, %v1479
        %v1496 = vsel %vm1464, %v1354, %v1480
        %v1497 = vsel %vm1465, %v1441, %v1481
        %v1498 = vsel %vm1466, %v1443, %v1482
        %v1499 = vsel %vm1467, %v1358, %v1483
        %v1500 = vsel %vm1468, %v1360, %v1484
        %v1501 = vsel %vm1469, %v1447, %v1485
        %v1502 = vsel %vm1470, %v1449, %v1486
        %v1503 = vsel %vm1471, %v1364, %v1487
        %v1504 = vsel %vm1472, %v1366, %v1488
        %v1505 = vsel %vm1473, %v1453, %v1489
        %v1506 = vsel %vm1474, %v1455, %v1490
        %v1507 = vsel %vm1475, %v1370, %v1491
        %v1508 = vsel %vm1476, %v1372, %v1492
        %v1509 = vsel %vm1477, %v1459, %v1493
        %v1510 = vsel %vm1478, %v1461, %v1494
        %v1511 = vmax.f32 %v1031, %v1495
        %v1512 = vmax.f32 %v1032, %v1499
        %v1513 = vmax.f32 %v1033, %v1503
        %v1514 = vmax.f32 %v1034, %v1507
        %v1515 = vadd.f32 %v1035, %v1495
        %v1516 = vadd.f32 %v1036, %v1499
        %v1517 = vadd.f32 %v1037, %v1503
        %v1518 = vadd.f32 %v1038, %v1507
        %v1519 = vmax.f32 %v1511, %v1496
        %v1520 = vmax.f32 %v1512, %v1500
        %v1521 = vmax.f32 %v1513, %v1504
        %v1522 = vmax.f32 %v1514, %v1508
        %v1523 = vadd.f32 %v1515, %v1496
        %v1524 = vadd.f32 %v1516, %v1500
        %v1525 = vadd.f32 %v1517, %v1504
        %v1526 = vadd.f32 %v1518, %v1508
        %v1527 = vmax.f32 %v1519, %v1497
        %v1528 = vmax.f32 %v1520, %v1501
        %v1529 = vmax.f32 %v1521, %v1505
        %v1530 = vmax.f32 %v1522, %v1509
        %v1531 = vadd.f32 %v1523, %v1497
        %v1532 = vadd.f32 %v1524, %v1501
        %v1533 = vadd.f32 %v1525, %v1505
        %v1534 = vadd.f32 %v1526, %v1509
        %v1535 = vmax.f32 %v1527, %v1498
        %v1536 = vmax.f32 %v1528, %v1502
        %v1537 = vmax.f32 %v1529, %v1506
        %v1538 = vmax.f32 %v1530, %v1510
        %v1539 = vadd.f32 %v1531, %v1498
        %v1540 = vadd.f32 %v1532, %v1502
        %v1541 = vadd.f32 %v1533, %v1506
        %v1542 = vadd.f32 %v1534, %v1510
        %v1543 = vmul.f32 %v1539, 0.125
        %v1544 = vmul.f32 %v1540, 0.125
        %v1545 = vmul.f32 %v1541, 0.125
        %v1546 = vmul.f32 %v1542, 0.125
        %vm1547 = vcmp.ge.f32.partialorder %v1535, 0.0
        %vm1548 = vcmp.ge.f32.partialorder %v1536, 0.0
        %vm1549 = vcmp.ge.f32.partialorder %v1537, 0.0
        %vm1550 = vcmp.ge.f32.partialorder %v1538, 0.0
        %v1551 = vmul.f32 %v1535, 0.01
        %v1552 = vmul.f32 %v1536, 0.01
        %v1553 = vmul.f32 %v1537, 0.01
        %v1554 = vmul.f32 %v1538, 0.01
        %v1555 = vsel %vm1547, %v1535, %v1551
        %v1556 = vsel %vm1548, %v1536, %v1552
        %v1557 = vsel %vm1549, %v1537, %v1553
        %v1558 = vsel %vm1550, %v1538, %v1554
        %1559 = vst [vmem:[%s351] sm:$0xff] %v1555
        %1560 = vst [vmem:[%s351 + $0x8] sm:$0xff] %v1556
        %1561 = vst [vmem:[%s351 + $0x10] sm:$0xff] %v1557
        %1562 = vst [vmem:[%s351 + $0x18] sm:$0xff] %v1558
        %vm1563 = vcmp.ge.f32.partialorder %v1543, 0.0
        %vm1564 = vcmp.ge.f32.partialorder %v1544, 0.0
        %vm1565 = vcmp.ge.f32.partialorder %v1545, 0.0
        %vm1566 = vcmp.ge.f32.partialorder %v1546, 0.0
        %v1567 = vmul.f32 %v1543, 0.01
        %v1568 = vmul.f32 %v1544, 0.01
        %v1569 = vmul.f32 %v1545, 0.01
        %v1570 = vmul.f32 %v1546, 0.01
        %v1571 = vsel %vm1563, %v1543, %v1567
        %v1572 = vsel %vm1564, %v1544, %v1568
        %v1573 = vsel %vm1565, %v1545, %v1569
        %v1574 = vsel %vm1566, %v1546, %v1570
        %1575 = vst [vmem:[%s351 + $0x20] sm:$0xff] %v1571
        %1576 = vst [vmem:[%s351 + $0x28] sm:$0xff] %v1572
        %1577 = vst [vmem:[%s351 + $0x30] sm:$0xff] %v1573
        %1578 = vst [vmem:[%s351 + $0x38] sm:$0xff] %v1574
        %vm1579 = vcmp.ge.f32.partialorder %v1539, 0.0
        %vm1580 = vcmp.ge.f32.partialorder %v1540, 0.0
        %vm1581 = vcmp.ge.f32.partialorder %v1541, 0.0
        %vm1582 = vcmp.ge.f32.partialorder %v1542, 0.0
        %v1583 = vmul.f32 %v1539, 0.01
        %v1584 = vmul.f32 %v1540, 0.01
        %v1585 = vmul.f32 %v1541, 0.01
        %v1586 = vmul.f32 %v1542, 0.01
        %v1587 = vsel %vm1579, %v1539, %v1583
        %v1588 = vsel %vm1580, %v1540, %v1584
        %v1589 = vsel %vm1581, %v1541, %v1585
        %v1590 = vsel %vm1582, %v1542, %v1586
        %1591 = vst [vmem:[%s351 + $0x40] sm:$0xff] %v1587
        %1592 = vst [vmem:[%s351 + $0x48] sm:$0xff] %v1588
        %1593 = vst [vmem:[%s351 + $0x50] sm:$0xff] %v1589
        %1594 = vst [vmem:[%s351 + $0x58] sm:$0xff] %v1590
        %s1595 = sand.u32 %s186, 1
        %s1596 = scalar_lea.sflag [#allocation4], %s1595
        %s1597 = sand.u32 %s186, 1
        %s1598 = smul.addr %s1597, 96
        %s1599 = scalar_lea.vmem [#allocation3], %s1598
        // Predicated region
        $region87: #{tpu_custom_call.1} parent=81 // pred_check
          %p1600 = pneg %p196
        $region88: #{tpu_custom_call.1} parent=81 // pred_check_branch
          %1602 = sbr.rel (%p1600) target = $region90
        $region89: #{tpu_custom_call.1} parent=81 // pred_region
          %s1604 = ssub.s32 1536, 1536
          %1605 = vsyncadd %s1596, %s1604
          %s1606 = smul.addr %s21, 128
          %s1607 = scalar_lea.hbm %s7, %s1606
          %s1608 = sshll.u32 %s1599, 4
          %s1609 = int_to_ptr.vmem [resolvable:$true] %s1608
          %1614 = dma.vmem_to_hbm [thread:$0]  %s1609, 1536, %s1607, %s1596, 128, 256, 8
        $region90: #{tpu_custom_call.1} parent=81 // pred_fallthru
          _
      $region82: #{tpu_custom_call.1} parent=5 // pred_fallthru
        _
      %p1615 = scmp.le.s32.totalorder 2, %s16
      // Predicated region
      $region91: #{tpu_custom_call.1} parent=5 // pred_check
        %p1616 = pneg %p1615
      $region92: #{tpu_custom_call.1} parent=5 // pred_check_branch
        %1618 = sbr.rel (%p1616) target = $region94
      $region93: #{tpu_custom_call.1} parent=5 // pred_region
        %s1619 = ssub.s32 %s16, 2
        // Predicated region
        $region95: #{tpu_custom_call.1} parent=93 // pred_check
          %p1620 = pneg %p202
        $region96: #{tpu_custom_call.1} parent=93 // pred_check_branch
          %1622 = sbr.rel (%p1620) target = $region98
        $region97: #{tpu_custom_call.1} parent=93 // pred_region
          %s1623 = sand.u32 %s187, 1
          %s1624 = scalar_lea.sflag [#allocation4], %s1623
          %s1625 = sand.u32 %s187, 1
          %s1626 = smul.addr %s1625, 96
          %s1627 = scalar_lea.vmem [#allocation3], %s1626
          %1628 = dma.done %s1624, 1536
        $region98: #{tpu_custom_call.1} parent=93 // pred_fallthru
          _
      $region94: #{tpu_custom_call.1} parent=5 // pred_fallthru
        _
    $region6: #{tpu_custom_call.1} parent=1 // loop_footer
      %s20 = sadd.s32 1, %s16
    $region7: #{tpu_custom_call.1} parent=1 // loop_footer_branch
      %15 = sbr.rel target = $region3
    $region8: #{tpu_custom_call.1} parent=1 // loop_exit
      _
    %1629 = vsyncpa [#allocation4], 1
    %s1630 = scalar_lea.sflag [#allocation4], 1
    %1631 = vsyncpa %s1630, 1

</llo_original>
